<compile_context>
chip_gen: v6e
topology: v6e:2x2x1
jax: 0.10.0
libtpu: 0.0.40
codegen_flags: <defaults>
</compile_context>

<pallas_src>
import functools

import jax
import jax.numpy as jnp
from jax.experimental import pallas as pl
from jax.experimental.pallas import tpu as pltpu


# --------------------------------------------------------------------------------------
# Pallas kernel: 2-layer LSTM time recurrence + final FC, fully VMEM-resident (no grid).
# --------------------------------------------------------------------------------------
def lstm_fc_kernel(xg_ref, whh0_ref, w1_ref, b1_ref, wfc_ref, bfc_ref, out_ref):
    # xg_ref  : (T, B, 4H) f32   precomputed x_t @ W_ih_l0^T + (b_ih_l0 + b_hh_l0), time-major
    # whh0_ref: (H, 4H)    bf16  W_hh_l0^T
    # w1_ref  : (2H, 4H)   bf16  [W_ih_l1^T ; W_hh_l1^T]  (stacked along K)
    # b1_ref  : (1, 4H)    f32   b_ih_l1 + b_hh_l1
    # wfc_ref : (H, O)     f32   fc.weight^T
    # bfc_ref : (1, O)     f32   fc.bias
    # out_ref : (B, O)     f32
    T, B, G = xg_ref.shape          # G = 4H
    H = whh0_ref.shape[0]

    # Hoist weight loads and the bias broadcast out of the recurrence
    # (JAX does not CSE broadcast_in_dim across loop iterations).
    whh0 = whh0_ref[...]                                   # (H, 4H)  bf16
    w1 = w1_ref[...]                                       # (2H, 4H) bf16
    b1 = jnp.broadcast_to(b1_ref[...], (B, G))             # (B, 4H)  f32, broadcast once

    def gate_act(gates):
        # Full 4H = 128-lane-width activations: one sigmoid + one tanh EUP pass,
        # then slice i / f / g / o (PyTorch gate order: i, f, g, o).
        s = jax.nn.sigmoid(gates)
        th = jnp.tanh(gates)
        i = s[:, 0 * H:1 * H]
        f = s[:, 1 * H:2 * H]
        g = th[:, 2 * H:3 * H]
        o = s[:, 3 * H:4 * H]
        return i, f, g, o

    def step(t, carry):
        h0, c0, h1, c1 = carry
        # ---- layer 0: only the hidden-state recurrence matmul remains in the loop;
        #      the input projection (+ layer-0 bias) was hoisted out entirely.
        g0 = xg_ref[t] + jnp.dot(h0.astype(jnp.bfloat16), whh0,
                                 preferred_element_type=jnp.float32)
        i0, f0, gg0, o0 = gate_act(g0)
        c0 = f0 * c0 + i0 * gg0
        h0 = o0 * jnp.tanh(c0)
        # ---- layer 1: fused [input-side | hidden-side] matmul over K = 2H.
        hcat = jnp.concatenate([h0, h1], axis=1).astype(jnp.bfloat16)   # (B, 2H)
        g1 = b1 + jnp.dot(hcat, w1, preferred_element_type=jnp.float32)
        i1, f1, gg1, o1 = gate_act(g1)
        c1 = f1 * c1 + i1 * gg1
        h1 = o1 * jnp.tanh(c1)
        return h0, c0, h1, c1

    zeros = jnp.zeros((B, H), jnp.float32)
    carry = (zeros, zeros, zeros, zeros)
    # T is static and small: fully unroll at trace time (static indices, straight-line code).
    for t in range(T):
        carry = step(t, carry)
    h1_last = carry[2]

    # fc on the last timestep's top-layer hidden state (kept f32; O=1 is a masked store,
    # negligible at this size — pad O to a multiple of 128 if output_size ever scales).
    out_ref[...] = (
        jnp.dot(h1_last, wfc_ref[...], preferred_element_type=jnp.float32) + bfc_ref[...]
    )


# --------------------------------------------------------------------------------------
# One-time parameter packing (NOT done per forward call).
# --------------------------------------------------------------------------------------
def pack_params(params):
    return {
        # layer-0 input projection operands (stay f32; used in the wrapper-hoisted matmul)
        "wih0_t": params["w_ih_l0"].T.astype(jnp.float32),                     # (I, 4H)
        "b0": (params["b_ih_l0"] + params["b_hh_l0"]).astype(jnp.float32),     # (4H,)
        # recurrence weights: bf16 MXU operands
        "whh0_t": params["w_hh_l0"].T.astype(jnp.bfloat16),                    # (H, 4H)
        "w1_t": jnp.concatenate([params["w_ih_l1"].T, params["w_hh_l1"].T],
                                axis=0).astype(jnp.bfloat16),                  # (2H, 4H)
        "b1": (params["b_ih_l1"] + params["b_hh_l1"])[None, :].astype(jnp.float32),  # (1, 4H)
        # final FC (f32)
        "wfc_t": params["fc_w"].T.astype(jnp.float32),                         # (H, O)
        "bfc": params["fc_b"][None, :].astype(jnp.float32),                    # (1, O)
    }


# --------------------------------------------------------------------------------------
# Forward wrapper: hoisted input projection + pallas_call
# --------------------------------------------------------------------------------------
@jax.jit
def lstm_model_forward(x, packed):
    """x: (B, T, input_size) float32, batch_first — same convention as the PyTorch module."""
    B, T, I = x.shape
    O = packed["wfc_t"].shape[1]

    # Hoisted layer-0 input projection (+ folded bias) for all T timesteps: one large,
    # fully parallel matmul; einsum writes it directly in time-major (T, B, 4H) layout
    # so there is no separate transpose pass over x.
    xg = jnp.einsum("bti,ig->tbg", x, packed["wih0_t"]) + packed["b0"]   # (T, B, 4H) f32

    vmem = pl.BlockSpec(memory_space=pltpu.MemorySpace.VMEM)
    out = pl.pallas_call(
        lstm_fc_kernel,
        out_shape=jax.ShapeDtypeStruct((B, O), jnp.float32),
        in_specs=[vmem] * 6,
        out_specs=vmem,
    )(xg, packed["whh0_t"], packed["w1_t"], packed["b1"], packed["wfc_t"], packed["bfc"])
    return out  # (B, O)


# --------------------------------------------------------------------------------------
# Deterministic parameter init (PyTorch-style uniform(-1/sqrt(H), 1/sqrt(H)))
# --------------------------------------------------------------------------------------
def init_params(key, input_size, hidden_size, output_size):
    H = hidden_size
    k = 1.0 / jnp.sqrt(jnp.float32(H))
    names_shapes = [
        ("w_ih_l0", (4 * H, input_size)),
        ("w_hh_l0", (4 * H, H)),
        ("b_ih_l0", (4 * H,)),
        ("b_hh_l0", (4 * H,)),
        ("w_ih_l1", (4 * H, H)),
        ("w_hh_l1", (4 * H, H)),
        ("b_ih_l1", (4 * H,)),
        ("b_hh_l1", (4 * H,)),
        ("fc_w", (output_size, H)),
        ("fc_b", (output_size,)),
    ]
    keys = jax.random.split(key, len(names_shapes))
    return {
        name: jax.random.uniform(kk, shape, jnp.float32, -k, k)
        for kk, (name, shape) in zip(keys, names_shapes)
    }


# --------------------------------------------------------------------------------------
# Pure-JAX reference mirroring nn.LSTM + nn.Linear semantics AND the kernel's precision
# choice (bf16 MXU operands for the recurrence matmuls, f32 accumulation/state).
# --------------------------------------------------------------------------------------
def lstm_model_reference(x, params, hidden_size):
    B, T, _ = x.shape
    H = hidden_size

    def mm_bf16(a, b):  # bf16-operand, f32-accumulate matmul (matches the kernel's MXU dtype)
        return jnp.dot(a.astype(jnp.bfloat16), b.astype(jnp.bfloat16),
                       preferred_element_type=jnp.float32)

    def acts(gates):
        i = jax.nn.sigmoid(gates[:, 0 * H:1 * H])
        f = jax.nn.sigmoid(gates[:, 1 * H:2 * H])
        g = jnp.tanh(gates[:, 2 * H:3 * H])
        o = jax.nn.sigmoid(gates[:, 3 * H:4 * H])
        return i, f, g, o

    # layer-0 input projection stays f32, as in the wrapper
    xg0 = (jnp.einsum("bti,gi->btg", x, params["w_ih_l0"])
           + params["b_ih_l0"] + params["b_hh_l0"])                       # (B, T, 4H)
    w1cat = jnp.concatenate([params["w_ih_l1"].T, params["w_hh_l1"].T], axis=0)  # (2H, 4H)
    b1 = params["b_ih_l1"] + params["b_hh_l1"]

    h0 = c0 = h1 = c1 = jnp.zeros((B, H), jnp.float32)
    for t in range(T):
        g0 = xg0[:, t] + mm_bf16(h0, params["w_hh_l0"].T)
        i, f, g, o = acts(g0)
        c0 = f * c0 + i * g
        h0 = o * jnp.tanh(c0)
        g1 = mm_bf16(jnp.concatenate([h0, h1], axis=1), w1cat) + b1
        i, f, g, o = acts(g1)
        c1 = f * c1 + i * g
        h1 = o * jnp.tanh(c1)
    return h1 @ params["fc_w"].T + params["fc_b"]


if __name__ == "__main__":
    # Small shapes consistent with the module's forward: (batch, seq, input_size)
    B, T, I = 2, 8, 1
    H, O = 32, 1

    key = jax.random.PRNGKey(0)
    k_params, k_x = jax.random.split(key)
    params = init_params(k_params, I, H, O)
    packed = pack_params(params)          # one-time packing, outside the forward pass
    x = jax.random.normal(k_x, (B, T, I), jnp.float32)

    out = lstm_model_forward(x, packed)
    out = jax.block_until_ready(out)

    ref = lstm_model_reference(x, params, H)
    assert out.shape == (B, O), f"bad output shape {out.shape}"
    assert jnp.allclose(out, ref, atol=1e-4, rtol=1e-4), (out, ref)

    print("KERNEL_OK")
</pallas_src>

<mosaic_0001>
module attributes {stable_mosaic.version = 11 : i64} {
  func.func @lstm_fc_kernel(%arg0: memref<8x2x128xf32, #tpu.memory_space<vmem>>, %arg1: memref<32x128xbf16, #tpu.memory_space<vmem>>, %arg2: memref<64x128xbf16, #tpu.memory_space<vmem>>, %arg3: memref<1x128xf32, #tpu.memory_space<vmem>>, %arg4: memref<32x1xf32, #tpu.memory_space<vmem>>, %arg5: memref<1x1xf32, #tpu.memory_space<vmem>>, %arg6: memref<2x1xf32, #tpu.memory_space<vmem>>) attributes {dimension_semantics = [], scalar_prefetch = 0 : i64, scratch_operands = 0 : i64, tpu.core_type = #tpu.core_type<tc>} {
    %c0 = arith.constant 0 : index
    %c0_0 = arith.constant 0 : index
    %0 = vector.load %arg1[%c0, %c0_0] : memref<32x128xbf16, #tpu.memory_space<vmem>>, vector<32x128xbf16>
    %c0_1 = arith.constant 0 : index
    %c0_2 = arith.constant 0 : index
    %1 = vector.load %arg2[%c0_1, %c0_2] : memref<64x128xbf16, #tpu.memory_space<vmem>>, vector<64x128xbf16>
    %c0_3 = arith.constant 0 : index
    %c0_4 = arith.constant 0 : index
    %2 = vector.load %arg3[%c0_3, %c0_4] : memref<1x128xf32, #tpu.memory_space<vmem>>, vector<1x128xf32>
    %3 = vector.shape_cast %2 : vector<1x128xf32> to vector<1x128xf32>
    %4 = vector.broadcast %3 : vector<1x128xf32> to vector<2x128xf32>
    %cst = arith.constant 0.000000e+00 : f32
    %5 = vector.broadcast %cst : f32 to vector<2x32xf32>
    %c0_5 = arith.constant 0 : index
    %c0_6 = arith.constant 0 : index
    %c0_7 = arith.constant 0 : index
    %6 = vector.load %arg0[%c0_5, %c0_6, %c0_7] : memref<8x2x128xf32, #tpu.memory_space<vmem>>, vector<1x2x128xf32>
    %7 = vector.shape_cast %6 : vector<1x2x128xf32> to vector<2x128xf32>
    %8 = arith.truncf %5 : vector<2x32xf32> to vector<2x32xbf16>
    %cst_8 = arith.constant dense<0.000000e+00> : vector<2x128xf32>
    %9 = tpu.matmul %8, %0, %cst_8 {dimension_numbers = #tpu.dot_dimension_numbers<[1], [0], [0], [1], [0, 0, 1, 1], [], []>} : vector<2x32xbf16>, vector<32x128xbf16>, vector<2x128xf32> -> vector<2x128xf32>
    %10 = arith.addf %7, %9 : vector<2x128xf32>
    %11 = arith.negf %10 : vector<2x128xf32>
    %12 = math.exp %11 : vector<2x128xf32>
    %cst_9 = arith.constant 1.000000e+00 : f32
    %13 = vector.broadcast %cst_9 : f32 to vector<2x128xf32>
    %14 = arith.addf %13, %12 : vector<2x128xf32>
    %15 = arith.divf %13, %14 : vector<2x128xf32>
    %16 = math.tanh %10 : vector<2x128xf32>
    %17 = vector.extract_strided_slice %15 {offsets = [0, 0], sizes = [2, 32], strides = [1, 1]} : vector<2x128xf32> to vector<2x32xf32>
    %18 = vector.extract_strided_slice %15 {offsets = [0, 32], sizes = [2, 32], strides = [1, 1]} : vector<2x128xf32> to vector<2x32xf32>
    %19 = vector.extract_strided_slice %16 {offsets = [0, 64], sizes = [2, 32], strides = [1, 1]} : vector<2x128xf32> to vector<2x32xf32>
    %20 = vector.extract_strided_slice %15 {offsets = [0, 96], sizes = [2, 32], strides = [1, 1]} : vector<2x128xf32> to vector<2x32xf32>
    %21 = arith.mulf %18, %5 : vector<2x32xf32>
    %22 = arith.mulf %17, %19 : vector<2x32xf32>
    %23 = arith.addf %21, %22 : vector<2x32xf32>
    %24 = math.tanh %23 : vector<2x32xf32>
    %25 = arith.mulf %20, %24 : vector<2x32xf32>
    %26 = tpu.concatenate %25, %5 in 1 : vector<2x32xf32>, vector<2x32xf32> -> vector<2x64xf32>
    %27 = arith.truncf %26 : vector<2x64xf32> to vector<2x64xbf16>
    %cst_10 = arith.constant dense<0.000000e+00> : vector<2x128xf32>
    %28 = tpu.matmul %27, %1, %cst_10 {dimension_numbers = #tpu.dot_dimension_numbers<[1], [0], [0], [1], [0, 0, 1, 1], [], []>} : vector<2x64xbf16>, vector<64x128xbf16>, vector<2x128xf32> -> vector<2x128xf32>
    %29 = arith.addf %4, %28 : vector<2x128xf32>
    %30 = arith.negf %29 : vector<2x128xf32>
    %31 = math.exp %30 : vector<2x128xf32>
    %cst_11 = arith.constant 1.000000e+00 : f32
    %32 = vector.broadcast %cst_11 : f32 to vector<2x128xf32>
    %33 = arith.addf %32, %31 : vector<2x128xf32>
    %34 = arith.divf %32, %33 : vector<2x128xf32>
    %35 = math.tanh %29 : vector<2x128xf32>
    %36 = vector.extract_strided_slice %34 {offsets = [0, 0], sizes = [2, 32], strides = [1, 1]} : vector<2x128xf32> to vector<2x32xf32>
    %37 = vector.extract_strided_slice %34 {offsets = [0, 32], sizes = [2, 32], strides = [1, 1]} : vector<2x128xf32> to vector<2x32xf32>
    %38 = vector.extract_strided_slice %35 {offsets = [0, 64], sizes = [2, 32], strides = [1, 1]} : vector<2x128xf32> to vector<2x32xf32>
    %39 = vector.extract_strided_slice %34 {offsets = [0, 96], sizes = [2, 32], strides = [1, 1]} : vector<2x128xf32> to vector<2x32xf32>
    %40 = arith.mulf %37, %5 : vector<2x32xf32>
    %41 = arith.mulf %36, %38 : vector<2x32xf32>
    %42 = arith.addf %40, %41 : vector<2x32xf32>
    %43 = math.tanh %42 : vector<2x32xf32>
    %44 = arith.mulf %39, %43 : vector<2x32xf32>
    %c1 = arith.constant 1 : index
    %c0_12 = arith.constant 0 : index
    %c0_13 = arith.constant 0 : index
    %45 = vector.load %arg0[%c1, %c0_12, %c0_13] : memref<8x2x128xf32, #tpu.memory_space<vmem>>, vector<1x2x128xf32>
    %46 = vector.shape_cast %45 : vector<1x2x128xf32> to vector<2x128xf32>
    %47 = arith.truncf %25 : vector<2x32xf32> to vector<2x32xbf16>
    %cst_14 = arith.constant dense<0.000000e+00> : vector<2x128xf32>
    %48 = tpu.matmul %47, %0, %cst_14 {dimension_numbers = #tpu.dot_dimension_numbers<[1], [0], [0], [1], [0, 0, 1, 1], [], []>} : vector<2x32xbf16>, vector<32x128xbf16>, vector<2x128xf32> -> vector<2x128xf32>
    %49 = arith.addf %46, %48 : vector<2x128xf32>
    %50 = arith.negf %49 : vector<2x128xf32>
    %51 = math.exp %50 : vector<2x128xf32>
    %cst_15 = arith.constant 1.000000e+00 : f32
    %52 = vector.broadcast %cst_15 : f32 to vector<2x128xf32>
    %53 = arith.addf %52, %51 : vector<2x128xf32>
    %54 = arith.divf %52, %53 : vector<2x128xf32>
    %55 = math.tanh %49 : vector<2x128xf32>
    %56 = vector.extract_strided_slice %54 {offsets = [0, 0], sizes = [2, 32], strides = [1, 1]} : vector<2x128xf32> to vector<2x32xf32>
    %57 = vector.extract_strided_slice %54 {offsets = [0, 32], sizes = [2, 32], strides = [1, 1]} : vector<2x128xf32> to vector<2x32xf32>
    %58 = vector.extract_strided_slice %55 {offsets = [0, 64], sizes = [2, 32], strides = [1, 1]} : vector<2x128xf32> to vector<2x32xf32>
    %59 = vector.extract_strided_slice %54 {offsets = [0, 96], sizes = [2, 32], strides = [1, 1]} : vector<2x128xf32> to vector<2x32xf32>
    %60 = arith.mulf %57, %23 : vector<2x32xf32>
    %61 = arith.mulf %56, %58 : vector<2x32xf32>
    %62 = arith.addf %60, %61 : vector<2x32xf32>
    %63 = math.tanh %62 : vector<2x32xf32>
    %64 = arith.mulf %59, %63 : vector<2x32xf32>
    %65 = tpu.concatenate %64, %44 in 1 : vector<2x32xf32>, vector<2x32xf32> -> vector<2x64xf32>
    %66 = arith.truncf %65 : vector<2x64xf32> to vector<2x64xbf16>
    %cst_16 = arith.constant dense<0.000000e+00> : vector<2x128xf32>
    %67 = tpu.matmul %66, %1, %cst_16 {dimension_numbers = #tpu.dot_dimension_numbers<[1], [0], [0], [1], [0, 0, 1, 1], [], []>} : vector<2x64xbf16>, vector<64x128xbf16>, vector<2x128xf32> -> vector<2x128xf32>
    %68 = arith.addf %4, %67 : vector<2x128xf32>
    %69 = arith.negf %68 : vector<2x128xf32>
    %70 = math.exp %69 : vector<2x128xf32>
    %cst_17 = arith.constant 1.000000e+00 : f32
    %71 = vector.broadcast %cst_17 : f32 to vector<2x128xf32>
    %72 = arith.addf %71, %70 : vector<2x128xf32>
    %73 = arith.divf %71, %72 : vector<2x128xf32>
    %74 = math.tanh %68 : vector<2x128xf32>
    %75 = vector.extract_strided_slice %73 {offsets = [0, 0], sizes = [2, 32], strides = [1, 1]} : vector<2x128xf32> to vector<2x32xf32>
    %76 = vector.extract_strided_slice %73 {offsets = [0, 32], sizes = [2, 32], strides = [1, 1]} : vector<2x128xf32> to vector<2x32xf32>
    %77 = vector.extract_strided_slice %74 {offsets = [0, 64], sizes = [2, 32], strides = [1, 1]} : vector<2x128xf32> to vector<2x32xf32>
    %78 = vector.extract_strided_slice %73 {offsets = [0, 96], sizes = [2, 32], strides = [1, 1]} : vector<2x128xf32> to vector<2x32xf32>
    %79 = arith.mulf %76, %42 : vector<2x32xf32>
    %80 = arith.mulf %75, %77 : vector<2x32xf32>
    %81 = arith.addf %79, %80 : vector<2x32xf32>
    %82 = math.tanh %81 : vector<2x32xf32>
    %83 = arith.mulf %78, %82 : vector<2x32xf32>
    %c2 = arith.constant 2 : index
    %c0_18 = arith.constant 0 : index
    %c0_19 = arith.constant 0 : index
    %84 = vector.load %arg0[%c2, %c0_18, %c0_19] : memref<8x2x128xf32, #tpu.memory_space<vmem>>, vector<1x2x128xf32>
    %85 = vector.shape_cast %84 : vector<1x2x128xf32> to vector<2x128xf32>
    %86 = arith.truncf %64 : vector<2x32xf32> to vector<2x32xbf16>
    %cst_20 = arith.constant dense<0.000000e+00> : vector<2x128xf32>
    %87 = tpu.matmul %86, %0, %cst_20 {dimension_numbers = #tpu.dot_dimension_numbers<[1], [0], [0], [1], [0, 0, 1, 1], [], []>} : vector<2x32xbf16>, vector<32x128xbf16>, vector<2x128xf32> -> vector<2x128xf32>
    %88 = arith.addf %85, %87 : vector<2x128xf32>
    %89 = arith.negf %88 : vector<2x128xf32>
    %90 = math.exp %89 : vector<2x128xf32>
    %cst_21 = arith.constant 1.000000e+00 : f32
    %91 = vector.broadcast %cst_21 : f32 to vector<2x128xf32>
    %92 = arith.addf %91, %90 : vector<2x128xf32>
    %93 = arith.divf %91, %92 : vector<2x128xf32>
    %94 = math.tanh %88 : vector<2x128xf32>
    %95 = vector.extract_strided_slice %93 {offsets = [0, 0], sizes = [2, 32], strides = [1, 1]} : vector<2x128xf32> to vector<2x32xf32>
    %96 = vector.extract_strided_slice %93 {offsets = [0, 32], sizes = [2, 32], strides = [1, 1]} : vector<2x128xf32> to vector<2x32xf32>
    %97 = vector.extract_strided_slice %94 {offsets = [0, 64], sizes = [2, 32], strides = [1, 1]} : vector<2x128xf32> to vector<2x32xf32>
    %98 = vector.extract_strided_slice %93 {offsets = [0, 96], sizes = [2, 32], strides = [1, 1]} : vector<2x128xf32> to vector<2x32xf32>
    %99 = arith.mulf %96, %62 : vector<2x32xf32>
    %100 = arith.mulf %95, %97 : vector<2x32xf32>
    %101 = arith.addf %99, %100 : vector<2x32xf32>
    %102 = math.tanh %101 : vector<2x32xf32>
    %103 = arith.mulf %98, %102 : vector<2x32xf32>
    %104 = tpu.concatenate %103, %83 in 1 : vector<2x32xf32>, vector<2x32xf32> -> vector<2x64xf32>
    %105 = arith.truncf %104 : vector<2x64xf32> to vector<2x64xbf16>
    %cst_22 = arith.constant dense<0.000000e+00> : vector<2x128xf32>
    %106 = tpu.matmul %105, %1, %cst_22 {dimension_numbers = #tpu.dot_dimension_numbers<[1], [0], [0], [1], [0, 0, 1, 1], [], []>} : vector<2x64xbf16>, vector<64x128xbf16>, vector<2x128xf32> -> vector<2x128xf32>
    %107 = arith.addf %4, %106 : vector<2x128xf32>
    %108 = arith.negf %107 : vector<2x128xf32>
    %109 = math.exp %108 : vector<2x128xf32>
    %cst_23 = arith.constant 1.000000e+00 : f32
    %110 = vector.broadcast %cst_23 : f32 to vector<2x128xf32>
    %111 = arith.addf %110, %109 : vector<2x128xf32>
    %112 = arith.divf %110, %111 : vector<2x128xf32>
    %113 = math.tanh %107 : vector<2x128xf32>
    %114 = vector.extract_strided_slice %112 {offsets = [0, 0], sizes = [2, 32], strides = [1, 1]} : vector<2x128xf32> to vector<2x32xf32>
    %115 = vector.extract_strided_slice %112 {offsets = [0, 32], sizes = [2, 32], strides = [1, 1]} : vector<2x128xf32> to vector<2x32xf32>
    %116 = vector.extract_strided_slice %113 {offsets = [0, 64], sizes = [2, 32], strides = [1, 1]} : vector<2x128xf32> to vector<2x32xf32>
    %117 = vector.extract_strided_slice %112 {offsets = [0, 96], sizes = [2, 32], strides = [1, 1]} : vector<2x128xf32> to vector<2x32xf32>
    %118 = arith.mulf %115, %81 : vector<2x32xf32>
    %119 = arith.mulf %114, %116 : vector<2x32xf32>
    %120 = arith.addf %118, %119 : vector<2x32xf32>
    %121 = math.tanh %120 : vector<2x32xf32>
    %122 = arith.mulf %117, %121 : vector<2x32xf32>
    %c3 = arith.constant 3 : index
    %c0_24 = arith.constant 0 : index
    %c0_25 = arith.constant 0 : index
    %123 = vector.load %arg0[%c3, %c0_24, %c0_25] : memref<8x2x128xf32, #tpu.memory_space<vmem>>, vector<1x2x128xf32>
    %124 = vector.shape_cast %123 : vector<1x2x128xf32> to vector<2x128xf32>
    %125 = arith.truncf %103 : vector<2x32xf32> to vector<2x32xbf16>
    %cst_26 = arith.constant dense<0.000000e+00> : vector<2x128xf32>
    %126 = tpu.matmul %125, %0, %cst_26 {dimension_numbers = #tpu.dot_dimension_numbers<[1], [0], [0], [1], [0, 0, 1, 1], [], []>} : vector<2x32xbf16>, vector<32x128xbf16>, vector<2x128xf32> -> vector<2x128xf32>
    %127 = arith.addf %124, %126 : vector<2x128xf32>
    %128 = arith.negf %127 : vector<2x128xf32>
    %129 = math.exp %128 : vector<2x128xf32>
    %cst_27 = arith.constant 1.000000e+00 : f32
    %130 = vector.broadcast %cst_27 : f32 to vector<2x128xf32>
    %131 = arith.addf %130, %129 : vector<2x128xf32>
    %132 = arith.divf %130, %131 : vector<2x128xf32>
    %133 = math.tanh %127 : vector<2x128xf32>
    %134 = vector.extract_strided_slice %132 {offsets = [0, 0], sizes = [2, 32], strides = [1, 1]} : vector<2x128xf32> to vector<2x32xf32>
    %135 = vector.extract_strided_slice %132 {offsets = [0, 32], sizes = [2, 32], strides = [1, 1]} : vector<2x128xf32> to vector<2x32xf32>
    %136 = vector.extract_strided_slice %133 {offsets = [0, 64], sizes = [2, 32], strides = [1, 1]} : vector<2x128xf32> to vector<2x32xf32>
    %137 = vector.extract_strided_slice %132 {offsets = [0, 96], sizes = [2, 32], strides = [1, 1]} : vector<2x128xf32> to vector<2x32xf32>
    %138 = arith.mulf %135, %101 : vector<2x32xf32>
    %139 = arith.mulf %134, %136 : vector<2x32xf32>
    %140 = arith.addf %138, %139 : vector<2x32xf32>
    %141 = math.tanh %140 : vector<2x32xf32>
    %142 = arith.mulf %137, %141 : vector<2x32xf32>
    %143 = tpu.concatenate %142, %122 in 1 : vector<2x32xf32>, vector<2x32xf32> -> vector<2x64xf32>
    %144 = arith.truncf %143 : vector<2x64xf32> to vector<2x64xbf16>
    %cst_28 = arith.constant dense<0.000000e+00> : vector<2x128xf32>
    %145 = tpu.matmul %144, %1, %cst_28 {dimension_numbers = #tpu.dot_dimension_numbers<[1], [0], [0], [1], [0, 0, 1, 1], [], []>} : vector<2x64xbf16>, vector<64x128xbf16>, vector<2x128xf32> -> vector<2x128xf32>
    %146 = arith.addf %4, %145 : vector<2x128xf32>
    %147 = arith.negf %146 : vector<2x128xf32>
    %148 = math.exp %147 : vector<2x128xf32>
    %cst_29 = arith.constant 1.000000e+00 : f32
    %149 = vector.broadcast %cst_29 : f32 to vector<2x128xf32>
    %150 = arith.addf %149, %148 : vector<2x128xf32>
    %151 = arith.divf %149, %150 : vector<2x128xf32>
    %152 = math.tanh %146 : vector<2x128xf32>
    %153 = vector.extract_strided_slice %151 {offsets = [0, 0], sizes = [2, 32], strides = [1, 1]} : vector<2x128xf32> to vector<2x32xf32>
    %154 = vector.extract_strided_slice %151 {offsets = [0, 32], sizes = [2, 32], strides = [1, 1]} : vector<2x128xf32> to vector<2x32xf32>
    %155 = vector.extract_strided_slice %152 {offsets = [0, 64], sizes = [2, 32], strides = [1, 1]} : vector<2x128xf32> to vector<2x32xf32>
    %156 = vector.extract_strided_slice %151 {offsets = [0, 96], sizes = [2, 32], strides = [1, 1]} : vector<2x128xf32> to vector<2x32xf32>
    %157 = arith.mulf %154, %120 : vector<2x32xf32>
    %158 = arith.mulf %153, %155 : vector<2x32xf32>
    %159 = arith.addf %157, %158 : vector<2x32xf32>
    %160 = math.tanh %159 : vector<2x32xf32>
    %161 = arith.mulf %156, %160 : vector<2x32xf32>
    %c4 = arith.constant 4 : index
    %c0_30 = arith.constant 0 : index
    %c0_31 = arith.constant 0 : index
    %162 = vector.load %arg0[%c4, %c0_30, %c0_31] : memref<8x2x128xf32, #tpu.memory_space<vmem>>, vector<1x2x128xf32>
    %163 = vector.shape_cast %162 : vector<1x2x128xf32> to vector<2x128xf32>
    %164 = arith.truncf %142 : vector<2x32xf32> to vector<2x32xbf16>
    %cst_32 = arith.constant dense<0.000000e+00> : vector<2x128xf32>
    %165 = tpu.matmul %164, %0, %cst_32 {dimension_numbers = #tpu.dot_dimension_numbers<[1], [0], [0], [1], [0, 0, 1, 1], [], []>} : vector<2x32xbf16>, vector<32x128xbf16>, vector<2x128xf32> -> vector<2x128xf32>
    %166 = arith.addf %163, %165 : vector<2x128xf32>
    %167 = arith.negf %166 : vector<2x128xf32>
    %168 = math.exp %167 : vector<2x128xf32>
    %cst_33 = arith.constant 1.000000e+00 : f32
    %169 = vector.broadcast %cst_33 : f32 to vector<2x128xf32>
    %170 = arith.addf %169, %168 : vector<2x128xf32>
    %171 = arith.divf %169, %170 : vector<2x128xf32>
    %172 = math.tanh %166 : vector<2x128xf32>
    %173 = vector.extract_strided_slice %171 {offsets = [0, 0], sizes = [2, 32], strides = [1, 1]} : vector<2x128xf32> to vector<2x32xf32>
    %174 = vector.extract_strided_slice %171 {offsets = [0, 32], sizes = [2, 32], strides = [1, 1]} : vector<2x128xf32> to vector<2x32xf32>
    %175 = vector.extract_strided_slice %172 {offsets = [0, 64], sizes = [2, 32], strides = [1, 1]} : vector<2x128xf32> to vector<2x32xf32>
    %176 = vector.extract_strided_slice %171 {offsets = [0, 96], sizes = [2, 32], strides = [1, 1]} : vector<2x128xf32> to vector<2x32xf32>
    %177 = arith.mulf %174, %140 : vector<2x32xf32>
    %178 = arith.mulf %173, %175 : vector<2x32xf32>
    %179 = arith.addf %177, %178 : vector<2x32xf32>
    %180 = math.tanh %179 : vector<2x32xf32>
    %181 = arith.mulf %176, %180 : vector<2x32xf32>
    %182 = tpu.concatenate %181, %161 in 1 : vector<2x32xf32>, vector<2x32xf32> -> vector<2x64xf32>
    %183 = arith.truncf %182 : vector<2x64xf32> to vector<2x64xbf16>
    %cst_34 = arith.constant dense<0.000000e+00> : vector<2x128xf32>
    %184 = tpu.matmul %183, %1, %cst_34 {dimension_numbers = #tpu.dot_dimension_numbers<[1], [0], [0], [1], [0, 0, 1, 1], [], []>} : vector<2x64xbf16>, vector<64x128xbf16>, vector<2x128xf32> -> vector<2x128xf32>
    %185 = arith.addf %4, %184 : vector<2x128xf32>
    %186 = arith.negf %185 : vector<2x128xf32>
    %187 = math.exp %186 : vector<2x128xf32>
    %cst_35 = arith.constant 1.000000e+00 : f32
    %188 = vector.broadcast %cst_35 : f32 to vector<2x128xf32>
    %189 = arith.addf %188, %187 : vector<2x128xf32>
    %190 = arith.divf %188, %189 : vector<2x128xf32>
    %191 = math.tanh %185 : vector<2x128xf32>
    %192 = vector.extract_strided_slice %190 {offsets = [0, 0], sizes = [2, 32], strides = [1, 1]} : vector<2x128xf32> to vector<2x32xf32>
    %193 = vector.extract_strided_slice %190 {offsets = [0, 32], sizes = [2, 32], strides = [1, 1]} : vector<2x128xf32> to vector<2x32xf32>
    %194 = vector.extract_strided_slice %191 {offsets = [0, 64], sizes = [2, 32], strides = [1, 1]} : vector<2x128xf32> to vector<2x32xf32>
    %195 = vector.extract_strided_slice %190 {offsets = [0, 96], sizes = [2, 32], strides = [1, 1]} : vector<2x128xf32> to vector<2x32xf32>
    %196 = arith.mulf %193, %159 : vector<2x32xf32>
    %197 = arith.mulf %192, %194 : vector<2x32xf32>
    %198 = arith.addf %196, %197 : vector<2x32xf32>
    %199 = math.tanh %198 : vector<2x32xf32>
    %200 = arith.mulf %195, %199 : vector<2x32xf32>
    %c5 = arith.constant 5 : index
    %c0_36 = arith.constant 0 : index
    %c0_37 = arith.constant 0 : index
    %201 = vector.load %arg0[%c5, %c0_36, %c0_37] : memref<8x2x128xf32, #tpu.memory_space<vmem>>, vector<1x2x128xf32>
    %202 = vector.shape_cast %201 : vector<1x2x128xf32> to vector<2x128xf32>
    %203 = arith.truncf %181 : vector<2x32xf32> to vector<2x32xbf16>
    %cst_38 = arith.constant dense<0.000000e+00> : vector<2x128xf32>
    %204 = tpu.matmul %203, %0, %cst_38 {dimension_numbers = #tpu.dot_dimension_numbers<[1], [0], [0], [1], [0, 0, 1, 1], [], []>} : vector<2x32xbf16>, vector<32x128xbf16>, vector<2x128xf32> -> vector<2x128xf32>
    %205 = arith.addf %202, %204 : vector<2x128xf32>
    %206 = arith.negf %205 : vector<2x128xf32>
    %207 = math.exp %206 : vector<2x128xf32>
    %cst_39 = arith.constant 1.000000e+00 : f32
    %208 = vector.broadcast %cst_39 : f32 to vector<2x128xf32>
    %209 = arith.addf %208, %207 : vector<2x128xf32>
    %210 = arith.divf %208, %209 : vector<2x128xf32>
    %211 = math.tanh %205 : vector<2x128xf32>
    %212 = vector.extract_strided_slice %210 {offsets = [0, 0], sizes = [2, 32], strides = [1, 1]} : vector<2x128xf32> to vector<2x32xf32>
    %213 = vector.extract_strided_slice %210 {offsets = [0, 32], sizes = [2, 32], strides = [1, 1]} : vector<2x128xf32> to vector<2x32xf32>
    %214 = vector.extract_strided_slice %211 {offsets = [0, 64], sizes = [2, 32], strides = [1, 1]} : vector<2x128xf32> to vector<2x32xf32>
    %215 = vector.extract_strided_slice %210 {offsets = [0, 96], sizes = [2, 32], strides = [1, 1]} : vector<2x128xf32> to vector<2x32xf32>
    %216 = arith.mulf %213, %179 : vector<2x32xf32>
    %217 = arith.mulf %212, %214 : vector<2x32xf32>
    %218 = arith.addf %216, %217 : vector<2x32xf32>
    %219 = math.tanh %218 : vector<2x32xf32>
    %220 = arith.mulf %215, %219 : vector<2x32xf32>
    %221 = tpu.concatenate %220, %200 in 1 : vector<2x32xf32>, vector<2x32xf32> -> vector<2x64xf32>
    %222 = arith.truncf %221 : vector<2x64xf32> to vector<2x64xbf16>
    %cst_40 = arith.constant dense<0.000000e+00> : vector<2x128xf32>
    %223 = tpu.matmul %222, %1, %cst_40 {dimension_numbers = #tpu.dot_dimension_numbers<[1], [0], [0], [1], [0, 0, 1, 1], [], []>} : vector<2x64xbf16>, vector<64x128xbf16>, vector<2x128xf32> -> vector<2x128xf32>
    %224 = arith.addf %4, %223 : vector<2x128xf32>
    %225 = arith.negf %224 : vector<2x128xf32>
    %226 = math.exp %225 : vector<2x128xf32>
    %cst_41 = arith.constant 1.000000e+00 : f32
    %227 = vector.broadcast %cst_41 : f32 to vector<2x128xf32>
    %228 = arith.addf %227, %226 : vector<2x128xf32>
    %229 = arith.divf %227, %228 : vector<2x128xf32>
    %230 = math.tanh %224 : vector<2x128xf32>
    %231 = vector.extract_strided_slice %229 {offsets = [0, 0], sizes = [2, 32], strides = [1, 1]} : vector<2x128xf32> to vector<2x32xf32>
    %232 = vector.extract_strided_slice %229 {offsets = [0, 32], sizes = [2, 32], strides = [1, 1]} : vector<2x128xf32> to vector<2x32xf32>
    %233 = vector.extract_strided_slice %230 {offsets = [0, 64], sizes = [2, 32], strides = [1, 1]} : vector<2x128xf32> to vector<2x32xf32>
    %234 = vector.extract_strided_slice %229 {offsets = [0, 96], sizes = [2, 32], strides = [1, 1]} : vector<2x128xf32> to vector<2x32xf32>
    %235 = arith.mulf %232, %198 : vector<2x32xf32>
    %236 = arith.mulf %231, %233 : vector<2x32xf32>
    %237 = arith.addf %235, %236 : vector<2x32xf32>
    %238 = math.tanh %237 : vector<2x32xf32>
    %239 = arith.mulf %234, %238 : vector<2x32xf32>
    %c6 = arith.constant 6 : index
    %c0_42 = arith.constant 0 : index
    %c0_43 = arith.constant 0 : index
    %240 = vector.load %arg0[%c6, %c0_42, %c0_43] : memref<8x2x128xf32, #tpu.memory_space<vmem>>, vector<1x2x128xf32>
    %241 = vector.shape_cast %240 : vector<1x2x128xf32> to vector<2x128xf32>
    %242 = arith.truncf %220 : vector<2x32xf32> to vector<2x32xbf16>
    %cst_44 = arith.constant dense<0.000000e+00> : vector<2x128xf32>
    %243 = tpu.matmul %242, %0, %cst_44 {dimension_numbers = #tpu.dot_dimension_numbers<[1], [0], [0], [1], [0, 0, 1, 1], [], []>} : vector<2x32xbf16>, vector<32x128xbf16>, vector<2x128xf32> -> vector<2x128xf32>
    %244 = arith.addf %241, %243 : vector<2x128xf32>
    %245 = arith.negf %244 : vector<2x128xf32>
    %246 = math.exp %245 : vector<2x128xf32>
    %cst_45 = arith.constant 1.000000e+00 : f32
    %247 = vector.broadcast %cst_45 : f32 to vector<2x128xf32>
    %248 = arith.addf %247, %246 : vector<2x128xf32>
    %249 = arith.divf %247, %248 : vector<2x128xf32>
    %250 = math.tanh %244 : vector<2x128xf32>
    %251 = vector.extract_strided_slice %249 {offsets = [0, 0], sizes = [2, 32], strides = [1, 1]} : vector<2x128xf32> to vector<2x32xf32>
    %252 = vector.extract_strided_slice %249 {offsets = [0, 32], sizes = [2, 32], strides = [1, 1]} : vector<2x128xf32> to vector<2x32xf32>
    %253 = vector.extract_strided_slice %250 {offsets = [0, 64], sizes = [2, 32], strides = [1, 1]} : vector<2x128xf32> to vector<2x32xf32>
    %254 = vector.extract_strided_slice %249 {offsets = [0, 96], sizes = [2, 32], strides = [1, 1]} : vector<2x128xf32> to vector<2x32xf32>
    %255 = arith.mulf %252, %218 : vector<2x32xf32>
    %256 = arith.mulf %251, %253 : vector<2x32xf32>
    %257 = arith.addf %255, %256 : vector<2x32xf32>
    %258 = math.tanh %257 : vector<2x32xf32>
    %259 = arith.mulf %254, %258 : vector<2x32xf32>
    %260 = tpu.concatenate %259, %239 in 1 : vector<2x32xf32>, vector<2x32xf32> -> vector<2x64xf32>
    %261 = arith.truncf %260 : vector<2x64xf32> to vector<2x64xbf16>
    %cst_46 = arith.constant dense<0.000000e+00> : vector<2x128xf32>
    %262 = tpu.matmul %261, %1, %cst_46 {dimension_numbers = #tpu.dot_dimension_numbers<[1], [0], [0], [1], [0, 0, 1, 1], [], []>} : vector<2x64xbf16>, vector<64x128xbf16>, vector<2x128xf32> -> vector<2x128xf32>
    %263 = arith.addf %4, %262 : vector<2x128xf32>
    %264 = arith.negf %263 : vector<2x128xf32>
    %265 = math.exp %264 : vector<2x128xf32>
    %cst_47 = arith.constant 1.000000e+00 : f32
    %266 = vector.broadcast %cst_47 : f32 to vector<2x128xf32>
    %267 = arith.addf %266, %265 : vector<2x128xf32>
    %268 = arith.divf %266, %267 : vector<2x128xf32>
    %269 = math.tanh %263 : vector<2x128xf32>
    %270 = vector.extract_strided_slice %268 {offsets = [0, 0], sizes = [2, 32], strides = [1, 1]} : vector<2x128xf32> to vector<2x32xf32>
    %271 = vector.extract_strided_slice %268 {offsets = [0, 32], sizes = [2, 32], strides = [1, 1]} : vector<2x128xf32> to vector<2x32xf32>
    %272 = vector.extract_strided_slice %269 {offsets = [0, 64], sizes = [2, 32], strides = [1, 1]} : vector<2x128xf32> to vector<2x32xf32>
    %273 = vector.extract_strided_slice %268 {offsets = [0, 96], sizes = [2, 32], strides = [1, 1]} : vector<2x128xf32> to vector<2x32xf32>
    %274 = arith.mulf %271, %237 : vector<2x32xf32>
    %275 = arith.mulf %270, %272 : vector<2x32xf32>
    %276 = arith.addf %274, %275 : vector<2x32xf32>
    %277 = math.tanh %276 : vector<2x32xf32>
    %278 = arith.mulf %273, %277 : vector<2x32xf32>
    %c7 = arith.constant 7 : index
    %c0_48 = arith.constant 0 : index
    %c0_49 = arith.constant 0 : index
    %279 = vector.load %arg0[%c7, %c0_48, %c0_49] : memref<8x2x128xf32, #tpu.memory_space<vmem>>, vector<1x2x128xf32>
    %280 = vector.shape_cast %279 : vector<1x2x128xf32> to vector<2x128xf32>
    %281 = arith.truncf %259 : vector<2x32xf32> to vector<2x32xbf16>
    %cst_50 = arith.constant dense<0.000000e+00> : vector<2x128xf32>
    %282 = tpu.matmul %281, %0, %cst_50 {dimension_numbers = #tpu.dot_dimension_numbers<[1], [0], [0], [1], [0, 0, 1, 1], [], []>} : vector<2x32xbf16>, vector<32x128xbf16>, vector<2x128xf32> -> vector<2x128xf32>
    %283 = arith.addf %280, %282 : vector<2x128xf32>
    %284 = arith.negf %283 : vector<2x128xf32>
    %285 = math.exp %284 : vector<2x128xf32>
    %cst_51 = arith.constant 1.000000e+00 : f32
    %286 = vector.broadcast %cst_51 : f32 to vector<2x128xf32>
    %287 = arith.addf %286, %285 : vector<2x128xf32>
    %288 = arith.divf %286, %287 : vector<2x128xf32>
    %289 = math.tanh %283 : vector<2x128xf32>
    %290 = vector.extract_strided_slice %288 {offsets = [0, 0], sizes = [2, 32], strides = [1, 1]} : vector<2x128xf32> to vector<2x32xf32>
    %291 = vector.extract_strided_slice %288 {offsets = [0, 32], sizes = [2, 32], strides = [1, 1]} : vector<2x128xf32> to vector<2x32xf32>
    %292 = vector.extract_strided_slice %289 {offsets = [0, 64], sizes = [2, 32], strides = [1, 1]} : vector<2x128xf32> to vector<2x32xf32>
    %293 = vector.extract_strided_slice %288 {offsets = [0, 96], sizes = [2, 32], strides = [1, 1]} : vector<2x128xf32> to vector<2x32xf32>
    %294 = arith.mulf %291, %257 : vector<2x32xf32>
    %295 = arith.mulf %290, %292 : vector<2x32xf32>
    %296 = arith.addf %294, %295 : vector<2x32xf32>
    %297 = math.tanh %296 : vector<2x32xf32>
    %298 = arith.mulf %293, %297 : vector<2x32xf32>
    %299 = tpu.concatenate %298, %278 in 1 : vector<2x32xf32>, vector<2x32xf32> -> vector<2x64xf32>
    %300 = arith.truncf %299 : vector<2x64xf32> to vector<2x64xbf16>
    %cst_52 = arith.constant dense<0.000000e+00> : vector<2x128xf32>
    %301 = tpu.matmul %300, %1, %cst_52 {dimension_numbers = #tpu.dot_dimension_numbers<[1], [0], [0], [1], [0, 0, 1, 1], [], []>} : vector<2x64xbf16>, vector<64x128xbf16>, vector<2x128xf32> -> vector<2x128xf32>
    %302 = arith.addf %4, %301 : vector<2x128xf32>
    %303 = arith.negf %302 : vector<2x128xf32>
    %304 = math.exp %303 : vector<2x128xf32>
    %cst_53 = arith.constant 1.000000e+00 : f32
    %305 = vector.broadcast %cst_53 : f32 to vector<2x128xf32>
    %306 = arith.addf %305, %304 : vector<2x128xf32>
    %307 = arith.divf %305, %306 : vector<2x128xf32>
    %308 = math.tanh %302 : vector<2x128xf32>
    %309 = vector.extract_strided_slice %307 {offsets = [0, 0], sizes = [2, 32], strides = [1, 1]} : vector<2x128xf32> to vector<2x32xf32>
    %310 = vector.extract_strided_slice %307 {offsets = [0, 32], sizes = [2, 32], strides = [1, 1]} : vector<2x128xf32> to vector<2x32xf32>
    %311 = vector.extract_strided_slice %308 {offsets = [0, 64], sizes = [2, 32], strides = [1, 1]} : vector<2x128xf32> to vector<2x32xf32>
    %312 = vector.extract_strided_slice %307 {offsets = [0, 96], sizes = [2, 32], strides = [1, 1]} : vector<2x128xf32> to vector<2x32xf32>
    %313 = arith.mulf %310, %276 : vector<2x32xf32>
    %314 = arith.mulf %309, %311 : vector<2x32xf32>
    %315 = arith.addf %313, %314 : vector<2x32xf32>
    %316 = math.tanh %315 : vector<2x32xf32>
    %317 = arith.mulf %312, %316 : vector<2x32xf32>
    %c0_54 = arith.constant 0 : index
    %c0_55 = arith.constant 0 : index
    %318 = vector.load %arg4[%c0_54, %c0_55] : memref<32x1xf32, #tpu.memory_space<vmem>>, vector<32x1xf32>
    %cst_56 = arith.constant dense<0.000000e+00> : vector<2x1xf32>
    %319 = tpu.matmul %317, %318, %cst_56 {dimension_numbers = #tpu.dot_dimension_numbers<[1], [0], [0], [1], [0, 0, 1, 1], [], []>} : vector<2x32xf32>, vector<32x1xf32>, vector<2x1xf32> -> vector<2x1xf32>
    %c0_57 = arith.constant 0 : index
    %c0_58 = arith.constant 0 : index
    %320 = vector.load %arg5[%c0_57, %c0_58] : memref<1x1xf32, #tpu.memory_space<vmem>>, vector<1x1xf32>
    %321 = vector.broadcast %320 : vector<1x1xf32> to vector<2x1xf32>
    %322 = arith.addf %319, %321 : vector<2x1xf32>
    %c0_59 = arith.constant 0 : index
    %c0_60 = arith.constant 0 : index
    %323 = vector.load %arg6[%c0_59, %c0_60] : memref<2x1xf32, #tpu.memory_space<vmem>>, vector<2x1xf32>
    tpu.vector_store %arg6[%c0_59, %c0_60], %322 {strides = array<i32>} : memref<2x1xf32, #tpu.memory_space<vmem>>, vector<2x1xf32>,
    return
  }
}

</mosaic_0001>

<llo_original>
// kernel: lstm_model_forward.1
$region0: #{lstm_model_forward.1}
  #allocation0 [shape = 'u32[]', space=smem, size = 0x4, offset = 0x4, fixed_abs, tag = 'smem constant byte address 0x4 - core index']
  #allocation1 [shape = 'u32[144,128]{1,0:T(1,128)}', space=vmem, size = 0x12000, scoped, tag = 'internal scratch']
  #allocation2 [shape = 'f32[1,1]{1,0:T(1,128)S(1)}', space=vmem, size = 0x200, scoped, tag = 'scoped memory for lstm_model_forward.1']
  %s0 = inlined_call_operand.vmem [shape: f32[8,2,128], index: 0, kind: input, shape index: {}]
  %s1 = inlined_call_operand.vmem [shape: bf16[32,128], index: 1, kind: input, shape index: {}]
  %s2 = inlined_call_operand.vmem [shape: bf16[64,128], index: 2, kind: input, shape index: {}]
  %s3 = inlined_call_operand.vmem [shape: f32[1,128], index: 3, kind: input, shape index: {}]
  %s4 = inlined_call_operand.vmem [shape: f32[32,1], index: 4, kind: input, shape index: {}]
  %s5 = inlined_call_operand.<no memory space> [shape: f32[1,1], index: 5, kind: input, shape index: {}]
  %s6 = inlined_call_operand.vmem [shape: f32[2,1], index: 6, kind: output, shape index: {}]
  %s7 = sld [smem:[#allocation0]]
  $region34: #{lstm_model_forward.1} parent=0
    _
  %s9 = ssub.s32 1, %s7
  %s10 = scalar_select 0, %s9, %s7
  %v11 = vstv %s5
  %12 = vst [vmem:[#allocation2] sm:$0x1] %v11
  // Predicated region
  $region2: #{lstm_model_forward.1} parent=0 // pred_check
    _
  $region3: #{lstm_model_forward.1} parent=0 // pred_check_branch
    %14 = sbr.rel (0) target = $region5
  $region4: #{lstm_model_forward.1} parent=0 // pred_region
    _
  $region5: #{lstm_model_forward.1} parent=0 // pred_fallthru
    _
  // Predicated region
  $region6: #{lstm_model_forward.1} parent=0 // pred_check
    _
  $region7: #{lstm_model_forward.1} parent=0 // pred_check_branch
    %16 = sbr.rel (0) target = $region9
  $region8: #{lstm_model_forward.1} parent=0 // pred_region
    _
  $region9: #{lstm_model_forward.1} parent=0 // pred_fallthru
    _
  // Predicated region
  $region10: #{lstm_model_forward.1} parent=0 // pred_check
    _
  $region11: #{lstm_model_forward.1} parent=0 // pred_check_branch
    %18 = sbr.rel (0) target = $region13
  $region12: #{lstm_model_forward.1} parent=0 // pred_region
    _
  $region13: #{lstm_model_forward.1} parent=0 // pred_fallthru
    _
  // Predicated region
  $region14: #{lstm_model_forward.1} parent=0 // pred_check
    _
  $region15: #{lstm_model_forward.1} parent=0 // pred_check_branch
    %20 = sbr.rel (0) target = $region17
  $region16: #{lstm_model_forward.1} parent=0 // pred_region
    _
  $region17: #{lstm_model_forward.1} parent=0 // pred_fallthru
    _
  // Predicated region
  $region18: #{lstm_model_forward.1} parent=0 // pred_check
    _
  $region19: #{lstm_model_forward.1} parent=0 // pred_check_branch
    %22 = sbr.rel (0) target = $region21
  $region20: #{lstm_model_forward.1} parent=0 // pred_region
    _
  $region21: #{lstm_model_forward.1} parent=0 // pred_fallthru
    _
  // Predicated region
  $region22: #{lstm_model_forward.1} parent=0 // pred_check
    _
  $region23: #{lstm_model_forward.1} parent=0 // pred_check_branch
    %24 = sbr.rel (0) target = $region25
  $region24: #{lstm_model_forward.1} parent=0 // pred_region
    _
  $region25: #{lstm_model_forward.1} parent=0 // pred_fallthru
    _
  %v26 = vld [vmem:[%s1] sm:$0xf]
  %v27 = vld [vmem:[%s1 + $0x4] sm:$0xf]
  %v28 = vld [vmem:[%s1 + $0x8] sm:$0xf]
  %v29 = vld [vmem:[%s1 + $0xc] sm:$0xf]
  %v30 = vld [vmem:[%s2] sm:$0xf]
  %v31 = vld [vmem:[%s2 + $0x4] sm:$0xf]
  %v32 = vld [vmem:[%s2 + $0x8] sm:$0xf]
  %v33 = vld [vmem:[%s2 + $0xc] sm:$0xf]
  %v34 = vld [vmem:[%s2 + $0x10] sm:$0xf]
  %v35 = vld [vmem:[%s2 + $0x14] sm:$0xf]
  %v36 = vld [vmem:[%s2 + $0x18] sm:$0xf]
  %v37 = vld [vmem:[%s2 + $0x1c] sm:$0xf]
  %v38 = vld [vmem:[%s3] sm:$0x1]
  %v40 = vlaneseq
  %v41 = vshrl.u32 %v40, 7
  %v42 = vsub.s32 0, %v41
  %v43 = vrot.slane %v38, %v42
  %v45 = vld [vmem:[%s0] sm:$0x3]
  %v50 = vunpack.c.l.b16 %v26
  %v51 = vunpack.c.l.b16 %v27
  %v52 = vunpack.c.l.b16 %v28
  %v53 = vunpack.c.l.b16 %v29
  %v54 = vpack.c.b16 %v51, %v50
  %v55 = vpack.c.b16 %v53, %v52
  %vm58 = vcmask 261120
  %v60 = vsel %vm58, 0, 0
  %62 = vmatprep.subr.bf16.mxu0 0
  %63 = vmatpush1.bf16.msra.mxu0 0
  %64 = vmatprep.subr.bf16.mxu0 0
  %65 = vmatpush1.bf16.msra.mxu0 0
  %66 = vmatprep.subr.bf16.mxu0 0
  %67 = vmatpush1.bf16.msra.mxu0 0
  %68 = vmatprep.subr.bf16.mxu0 0
  %69 = vmatpush1.bf16.msra.mxu0 0
  %70 = vmatprep.subr.bf16.mxu0 0
  %71 = vmatpush1.bf16.msra.mxu0 0
  %72 = vmatprep.subr.bf16.mxu0 0
  %73 = vmatpush1.bf16.msra.mxu0 0
  %74 = vmatprep.subr.bf16.mxu0 0
  %75 = vmatpush1.bf16.msra.mxu0 %v55
  %76 = vmatprep.subr.bf16.mxu0 0
  %77 = vmatpush1.bf16.msra.mxu0 %v54
  %78 = vmatprep.subr.bf16.mxu0 0
  %79 = vmatpush2.bf16.msra.mxu0 0
  %80 = vmatprep.subr.bf16.mxu0 0
  %81 = vmatpush2.bf16.msra.mxu0 0
  %82 = vmatprep.subr.bf16.mxu0 0
  %83 = vmatpush2.bf16.msra.mxu0 0
  %84 = vmatprep.subr.bf16.mxu0 0
  %85 = vmatpush2.bf16.msra.mxu0 0
  %86 = vmatprep.subr.bf16.mxu0 0
  %87 = vmatpush2.bf16.msra.mxu0 0
  %88 = vmatprep.subr.bf16.mxu0 0
  %89 = vmatpush2.bf16.msra.mxu0 0
  %90 = vmatprep.subr.bf16.mxu0 0
  %91 = vmatpush2.bf16.msra.mxu0 0
  %92 = vmatprep.subr.bf16.mxu0 0
  %93 = vmatpush2.bf16.msra.mxu0 0
  %94 = vmatprep.mubr.bf16.mxu0 0
  %95 = vmatmul.mubr.bf16.gmra.mxu0 %v60
  %v96 = vpop.f32.mrf.mxu0
  %v97 = vadd.f32 0.0, %v96
  %v98 = vpop.f32.mrf.mxu0
  %v99 = vpop.f32.mrf.mxu0
  %v100 = vpop.f32.mrf.mxu0
  %101 = vdwg.mxu0
  %v102 = vadd.f32 %v45, %v97
  %v103 = vxor.u32 %v102, 2147483648
  %v104 = vmul.f32 %v103, 1.442695
  %v105 = vpow.pop %v104
  %v106 = vadd.f32 %v105, 1.0
  %v107 = vrcp.pop %v106
  %v108 = vmul.f32 1.0, %v107
  %v109 = vtanh.pop %v102
  %v110 = vmul.f32 %v108, 0.0
  %112 = vrot.lane.b32.xlu0 %v109, 64
  %v113 = vpop.permute.xlu0 %112
  %v115 = vmul.f32 %v108, %v113
  %117 = vrot.lane.b32.xlu0 %v115, 32
  %v118 = vpop.permute.xlu0 %117
  %v120 = vadd.f32 %v110, %v118
  %v121 = vtanh.pop %v120
  %123 = vrot.lane.b32.xlu0 %v121, 64
  %v124 = vpop.permute.xlu0 %123
  %v126 = vmul.f32 %v108, %v124
  %128 = vrot.lane.b32.xlu0 %v126, 32
  %v129 = vpop.permute.xlu0 %128
  %v131 = vsel %vm58, %v129, 0.0
  %v132 = vpack.c.bf16 %v131, %v131
  %v141 = vunpack.c.l.b16 %v30
  %v142 = vunpack.c.l.b16 %v31
  %v143 = vunpack.c.l.b16 %v32
  %v144 = vunpack.c.l.b16 %v33
  %v145 = vunpack.c.l.b16 %v34
  %v146 = vunpack.c.l.b16 %v35
  %v147 = vunpack.c.l.b16 %v36
  %v148 = vunpack.c.l.b16 %v37
  %v149 = vpack.c.b16 %v142, %v141
  %v150 = vpack.c.b16 %v144, %v143
  %v151 = vpack.c.b16 %v146, %v145
  %v152 = vpack.c.b16 %v148, %v147
  %vm157 = vcmask 523264
  %v159 = vsel %vm157, %v132, 0
  %161 = vmatprep.subr.bf16.mxu0 0
  %162 = vmatpush1.bf16.msra.mxu0 0
  %163 = vmatprep.subr.bf16.mxu0 0
  %164 = vmatpush1.bf16.msra.mxu0 0
  %165 = vmatprep.subr.bf16.mxu0 0
  %166 = vmatpush1.bf16.msra.mxu0 0
  %167 = vmatprep.subr.bf16.mxu0 0
  %168 = vmatpush1.bf16.msra.mxu0 0
  %169 = vmatprep.subr.bf16.mxu0 0
  %170 = vmatpush1.bf16.msra.mxu0 %v152
  %171 = vmatprep.subr.bf16.mxu0 0
  %172 = vmatpush1.bf16.msra.mxu0 %v151
  %173 = vmatprep.subr.bf16.mxu0 0
  %174 = vmatpush1.bf16.msra.mxu0 %v150
  %175 = vmatprep.subr.bf16.mxu0 0
  %176 = vmatpush1.bf16.msra.mxu0 %v149
  %177 = vmatprep.subr.bf16.mxu0 0
  %178 = vmatpush2.bf16.msra.mxu0 0
  %179 = vmatprep.subr.bf16.mxu0 0
  %180 = vmatpush2.bf16.msra.mxu0 0
  %181 = vmatprep.subr.bf16.mxu0 0
  %182 = vmatpush2.bf16.msra.mxu0 0
  %183 = vmatprep.subr.bf16.mxu0 0
  %184 = vmatpush2.bf16.msra.mxu0 0
  %185 = vmatprep.subr.bf16.mxu0 0
  %186 = vmatpush2.bf16.msra.mxu0 0
  %187 = vmatprep.subr.bf16.mxu0 0
  %188 = vmatpush2.bf16.msra.mxu0 0
  %189 = vmatprep.subr.bf16.mxu0 0
  %190 = vmatpush2.bf16.msra.mxu0 0
  %191 = vmatprep.subr.bf16.mxu0 0
  %192 = vmatpush2.bf16.msra.mxu0 0
  %193 = vmatprep.mubr.bf16.mxu0 0
  %194 = vmatmul.mubr.bf16.gmra.mxu0 %v159
  %v195 = vpop.f32.mrf.mxu0
  %v196 = vadd.f32 0.0, %v195
  %v197 = vpop.f32.mrf.mxu0
  %v198 = vpop.f32.mrf.mxu0
  %v199 = vpop.f32.mrf.mxu0
  %200 = vdwg.mxu0
  %v201 = vadd.f32 %v43, %v196
  %v202 = vxor.u32 %v201, 2147483648
  %v203 = vmul.f32 %v202, 1.442695
  %v204 = vpow.pop %v203
  %v205 = vadd.f32 %v204, 1.0
  %v206 = vrcp.pop %v205
  %v207 = vmul.f32 1.0, %v206
  %v208 = vtanh.pop %v201
  %v209 = vmul.f32 %v207, 0.0
  %211 = vrot.lane.b32.xlu0 %v208, 64
  %v212 = vpop.permute.xlu0 %211
  %v214 = vmul.f32 %v207, %v212
  %216 = vrot.lane.b32.xlu0 %v214, 32
  %v217 = vpop.permute.xlu0 %216
  %v219 = vadd.f32 %v209, %v217
  %v220 = vtanh.pop %v219
  %222 = vrot.lane.b32.xlu0 %v220, 64
  %v223 = vpop.permute.xlu0 %222
  %v225 = vmul.f32 %v207, %v223
  %s226 = scalar_lea.vmem %s0, 2
  %v227 = vld [vmem:[%s226] sm:$0x3]
  %v228 = vpack.c.bf16 %v126, %v126
  %230 = vrot.lane.b32.xlu0 %v228, 32
  %v231 = vpop.permute.xlu0 %230
  %v233 = vsel %vm58, %v231, 0
  %235 = vmatprep.subr.bf16.mxu0 0
  %236 = vmatpush1.bf16.msra.mxu0 0
  %237 = vmatprep.subr.bf16.mxu0 0
  %238 = vmatpush1.bf16.msra.mxu0 0
  %239 = vmatprep.subr.bf16.mxu0 0
  %240 = vmatpush1.bf16.msra.mxu0 0
  %241 = vmatprep.subr.bf16.mxu0 0
  %242 = vmatpush1.bf16.msra.mxu0 0
  %243 = vmatprep.subr.bf16.mxu0 0
  %244 = vmatpush1.bf16.msra.mxu0 0
  %245 = vmatprep.subr.bf16.mxu0 0
  %246 = vmatpush1.bf16.msra.mxu0 0
  %247 = vmatprep.subr.bf16.mxu0 0
  %248 = vmatpush1.bf16.msra.mxu0 %v55
  %249 = vmatprep.subr.bf16.mxu0 0
  %250 = vmatpush1.bf16.msra.mxu0 %v54
  %251 = vmatprep.subr.bf16.mxu0 0
  %252 = vmatpush2.bf16.msra.mxu0 0
  %253 = vmatprep.subr.bf16.mxu0 0
  %254 = vmatpush2.bf16.msra.mxu0 0
  %255 = vmatprep.subr.bf16.mxu0 0
  %256 = vmatpush2.bf16.msra.mxu0 0
  %257 = vmatprep.subr.bf16.mxu0 0
  %258 = vmatpush2.bf16.msra.mxu0 0
  %259 = vmatprep.subr.bf16.mxu0 0
  %260 = vmatpush2.bf16.msra.mxu0 0
  %261 = vmatprep.subr.bf16.mxu0 0
  %262 = vmatpush2.bf16.msra.mxu0 0
  %263 = vmatprep.subr.bf16.mxu0 0
  %264 = vmatpush2.bf16.msra.mxu0 0
  %265 = vmatprep.subr.bf16.mxu0 0
  %266 = vmatpush2.bf16.msra.mxu0 0
  %267 = vmatprep.mubr.bf16.mxu0 0
  %268 = vmatmul.mubr.bf16.gmra.mxu0 %v233
  %v269 = vpop.f32.mrf.mxu0
  %v270 = vadd.f32 0.0, %v269
  %v271 = vpop.f32.mrf.mxu0
  %v272 = vpop.f32.mrf.mxu0
  %v273 = vpop.f32.mrf.mxu0
  %274 = vdwg.mxu0
  %v275 = vadd.f32 %v227, %v270
  %v276 = vxor.u32 %v275, 2147483648
  %v277 = vmul.f32 %v276, 1.442695
  %v278 = vpow.pop %v277
  %v279 = vadd.f32 %v278, 1.0
  %v280 = vrcp.pop %v279
  %v281 = vmul.f32 1.0, %v280
  %v282 = vtanh.pop %v275
  %v283 = vmul.f32 %v281, %v120
  %285 = vrot.lane.b32.xlu0 %v282, 64
  %v286 = vpop.permute.xlu0 %285
  %v288 = vmul.f32 %v281, %v286
  %290 = vrot.lane.b32.xlu0 %v288, 32
  %v291 = vpop.permute.xlu0 %290
  %v293 = vadd.f32 %v283, %v291
  %v294 = vtanh.pop %v293
  %296 = vrot.lane.b32.xlu0 %v294, 64
  %v297 = vpop.permute.xlu0 %296
  %v299 = vmul.f32 %v281, %v297
  %301 = vrot.lane.b32.xlu0 %v299, 32
  %v302 = vpop.permute.xlu0 %301
  %305 = vrot.lane.b32.xlu0 %v225, 64
  %v306 = vpop.permute.xlu0 %305
  %v308 = vsel %vm58, %v302, %v306
  %v309 = vpack.c.bf16 %v308, %v308
  %v311 = vsel %vm157, %v309, 0
  %313 = vmatprep.subr.bf16.mxu0 0
  %314 = vmatpush1.bf16.msra.mxu0 0
  %315 = vmatprep.subr.bf16.mxu0 0
  %316 = vmatpush1.bf16.msra.mxu0 0
  %317 = vmatprep.subr.bf16.mxu0 0
  %318 = vmatpush1.bf16.msra.mxu0 0
  %319 = vmatprep.subr.bf16.mxu0 0
  %320 = vmatpush1.bf16.msra.mxu0 0
  %321 = vmatprep.subr.bf16.mxu0 0
  %322 = vmatpush1.bf16.msra.mxu0 %v152
  %323 = vmatprep.subr.bf16.mxu0 0
  %324 = vmatpush1.bf16.msra.mxu0 %v151
  %325 = vmatprep.subr.bf16.mxu0 0
  %326 = vmatpush1.bf16.msra.mxu0 %v150
  %327 = vmatprep.subr.bf16.mxu0 0
  %328 = vmatpush1.bf16.msra.mxu0 %v149
  %329 = vmatprep.subr.bf16.mxu0 0
  %330 = vmatpush2.bf16.msra.mxu0 0
  %331 = vmatprep.subr.bf16.mxu0 0
  %332 = vmatpush2.bf16.msra.mxu0 0
  %333 = vmatprep.subr.bf16.mxu0 0
  %334 = vmatpush2.bf16.msra.mxu0 0
  %335 = vmatprep.subr.bf16.mxu0 0
  %336 = vmatpush2.bf16.msra.mxu0 0
  %337 = vmatprep.subr.bf16.mxu0 0
  %338 = vmatpush2.bf16.msra.mxu0 0
  %339 = vmatprep.subr.bf16.mxu0 0
  %340 = vmatpush2.bf16.msra.mxu0 0
  %341 = vmatprep.subr.bf16.mxu0 0
  %342 = vmatpush2.bf16.msra.mxu0 0
  %343 = vmatprep.subr.bf16.mxu0 0
  %344 = vmatpush2.bf16.msra.mxu0 0
  %345 = vmatprep.mubr.bf16.mxu0 0
  %346 = vmatmul.mubr.bf16.gmra.mxu0 %v311
  %v347 = vpop.f32.mrf.mxu0
  %v348 = vadd.f32 0.0, %v347
  %v349 = vpop.f32.mrf.mxu0
  %v350 = vpop.f32.mrf.mxu0
  %v351 = vpop.f32.mrf.mxu0
  %352 = vdwg.mxu0
  %v353 = vadd.f32 %v43, %v348
  %v354 = vxor.u32 %v353, 2147483648
  %v355 = vmul.f32 %v354, 1.442695
  %v356 = vpow.pop %v355
  %v357 = vadd.f32 %v356, 1.0
  %v358 = vrcp.pop %v357
  %v359 = vmul.f32 1.0, %v358
  %v360 = vtanh.pop %v353
  %v361 = vmul.f32 %v359, %v219
  %363 = vrot.lane.b32.xlu0 %v360, 64
  %v364 = vpop.permute.xlu0 %363
  %v366 = vmul.f32 %v359, %v364
  %368 = vrot.lane.b32.xlu0 %v366, 32
  %v369 = vpop.permute.xlu0 %368
  %v371 = vadd.f32 %v361, %v369
  %v372 = vtanh.pop %v371
  %374 = vrot.lane.b32.xlu0 %v372, 64
  %v375 = vpop.permute.xlu0 %374
  %v377 = vmul.f32 %v359, %v375
  %s378 = scalar_lea.vmem %s0, 4
  %v379 = vld [vmem:[%s378] sm:$0x3]
  %v380 = vpack.c.bf16 %v299, %v299
  %382 = vrot.lane.b32.xlu0 %v380, 32
  %v383 = vpop.permute.xlu0 %382
  %v385 = vsel %vm58, %v383, 0
  %387 = vmatprep.subr.bf16.mxu0 0
  %388 = vmatpush1.bf16.msra.mxu0 0
  %389 = vmatprep.subr.bf16.mxu0 0
  %390 = vmatpush1.bf16.msra.mxu0 0
  %391 = vmatprep.subr.bf16.mxu0 0
  %392 = vmatpush1.bf16.msra.mxu0 0
  %393 = vmatprep.subr.bf16.mxu0 0
  %394 = vmatpush1.bf16.msra.mxu0 0
  %395 = vmatprep.subr.bf16.mxu0 0
  %396 = vmatpush1.bf16.msra.mxu0 0
  %397 = vmatprep.subr.bf16.mxu0 0
  %398 = vmatpush1.bf16.msra.mxu0 0
  %399 = vmatprep.subr.bf16.mxu0 0
  %400 = vmatpush1.bf16.msra.mxu0 %v55
  %401 = vmatprep.subr.bf16.mxu0 0
  %402 = vmatpush1.bf16.msra.mxu0 %v54
  %403 = vmatprep.subr.bf16.mxu0 0
  %404 = vmatpush2.bf16.msra.mxu0 0
  %405 = vmatprep.subr.bf16.mxu0 0
  %406 = vmatpush2.bf16.msra.mxu0 0
  %407 = vmatprep.subr.bf16.mxu0 0
  %408 = vmatpush2.bf16.msra.mxu0 0
  %409 = vmatprep.subr.bf16.mxu0 0
  %410 = vmatpush2.bf16.msra.mxu0 0
  %411 = vmatprep.subr.bf16.mxu0 0
  %412 = vmatpush2.bf16.msra.mxu0 0
  %413 = vmatprep.subr.bf16.mxu0 0
  %414 = vmatpush2.bf16.msra.mxu0 0
  %415 = vmatprep.subr.bf16.mxu0 0
  %416 = vmatpush2.bf16.msra.mxu0 0
  %417 = vmatprep.subr.bf16.mxu0 0
  %418 = vmatpush2.bf16.msra.mxu0 0
  %419 = vmatprep.mubr.bf16.mxu0 0
  %420 = vmatmul.mubr.bf16.gmra.mxu0 %v385
  %v421 = vpop.f32.mrf.mxu0
  %v422 = vadd.f32 0.0, %v421
  %v423 = vpop.f32.mrf.mxu0
  %v424 = vpop.f32.mrf.mxu0
  %v425 = vpop.f32.mrf.mxu0
  %426 = vdwg.mxu0
  %v427 = vadd.f32 %v379, %v422
  %v428 = vxor.u32 %v427, 2147483648
  %v429 = vmul.f32 %v428, 1.442695
  %v430 = vpow.pop %v429
  %v431 = vadd.f32 %v430, 1.0
  %v432 = vrcp.pop %v431
  %v433 = vmul.f32 1.0, %v432
  %v434 = vtanh.pop %v427
  %v435 = vmul.f32 %v433, %v293
  %437 = vrot.lane.b32.xlu0 %v434, 64
  %v438 = vpop.permute.xlu0 %437
  %v440 = vmul.f32 %v433, %v438
  %442 = vrot.lane.b32.xlu0 %v440, 32
  %v443 = vpop.permute.xlu0 %442
  %v445 = vadd.f32 %v435, %v443
  %v446 = vtanh.pop %v445
  %448 = vrot.lane.b32.xlu0 %v446, 64
  %v449 = vpop.permute.xlu0 %448
  %v451 = vmul.f32 %v433, %v449
  %453 = vrot.lane.b32.xlu0 %v451, 32
  %v454 = vpop.permute.xlu0 %453
  %457 = vrot.lane.b32.xlu0 %v377, 64
  %v458 = vpop.permute.xlu0 %457
  %v460 = vsel %vm58, %v454, %v458
  %v461 = vpack.c.bf16 %v460, %v460
  %v463 = vsel %vm157, %v461, 0
  %465 = vmatprep.subr.bf16.mxu0 0
  %466 = vmatpush1.bf16.msra.mxu0 0
  %467 = vmatprep.subr.bf16.mxu0 0
  %468 = vmatpush1.bf16.msra.mxu0 0
  %469 = vmatprep.subr.bf16.mxu0 0
  %470 = vmatpush1.bf16.msra.mxu0 0
  %471 = vmatprep.subr.bf16.mxu0 0
  %472 = vmatpush1.bf16.msra.mxu0 0
  %473 = vmatprep.subr.bf16.mxu0 0
  %474 = vmatpush1.bf16.msra.mxu0 %v152
  %475 = vmatprep.subr.bf16.mxu0 0
  %476 = vmatpush1.bf16.msra.mxu0 %v151
  %477 = vmatprep.subr.bf16.mxu0 0
  %478 = vmatpush1.bf16.msra.mxu0 %v150
  %479 = vmatprep.subr.bf16.mxu0 0
  %480 = vmatpush1.bf16.msra.mxu0 %v149
  %481 = vmatprep.subr.bf16.mxu0 0
  %482 = vmatpush2.bf16.msra.mxu0 0
  %483 = vmatprep.subr.bf16.mxu0 0
  %484 = vmatpush2.bf16.msra.mxu0 0
  %485 = vmatprep.subr.bf16.mxu0 0
  %486 = vmatpush2.bf16.msra.mxu0 0
  %487 = vmatprep.subr.bf16.mxu0 0
  %488 = vmatpush2.bf16.msra.mxu0 0
  %489 = vmatprep.subr.bf16.mxu0 0
  %490 = vmatpush2.bf16.msra.mxu0 0
  %491 = vmatprep.subr.bf16.mxu0 0
  %492 = vmatpush2.bf16.msra.mxu0 0
  %493 = vmatprep.subr.bf16.mxu0 0
  %494 = vmatpush2.bf16.msra.mxu0 0
  %495 = vmatprep.subr.bf16.mxu0 0
  %496 = vmatpush2.bf16.msra.mxu0 0
  %497 = vmatprep.mubr.bf16.mxu0 0
  %498 = vmatmul.mubr.bf16.gmra.mxu0 %v463
  %v499 = vpop.f32.mrf.mxu0
  %v500 = vadd.f32 0.0, %v499
  %v501 = vpop.f32.mrf.mxu0
  %v502 = vpop.f32.mrf.mxu0
  %v503 = vpop.f32.mrf.mxu0
  %504 = vdwg.mxu0
  %v505 = vadd.f32 %v43, %v500
  %v506 = vxor.u32 %v505, 2147483648
  %v507 = vmul.f32 %v506, 1.442695
  %v508 = vpow.pop %v507
  %v509 = vadd.f32 %v508, 1.0
  %v510 = vrcp.pop %v509
  %v511 = vmul.f32 1.0, %v510
  %v512 = vtanh.pop %v505
  %v513 = vmul.f32 %v511, %v371
  %515 = vrot.lane.b32.xlu0 %v512, 64
  %v516 = vpop.permute.xlu0 %515
  %v518 = vmul.f32 %v511, %v516
  %520 = vrot.lane.b32.xlu0 %v518, 32
  %v521 = vpop.permute.xlu0 %520
  %v523 = vadd.f32 %v513, %v521
  %v524 = vtanh.pop %v523
  %526 = vrot.lane.b32.xlu0 %v524, 64
  %v527 = vpop.permute.xlu0 %526
  %v529 = vmul.f32 %v511, %v527
  %s530 = scalar_lea.vmem %s0, 6
  %v531 = vld [vmem:[%s530] sm:$0x3]
  %v532 = vpack.c.bf16 %v451, %v451
  %534 = vrot.lane.b32.xlu0 %v532, 32
  %v535 = vpop.permute.xlu0 %534
  %v537 = vsel %vm58, %v535, 0
  %539 = vmatprep.subr.bf16.mxu0 0
  %540 = vmatpush1.bf16.msra.mxu0 0
  %541 = vmatprep.subr.bf16.mxu0 0
  %542 = vmatpush1.bf16.msra.mxu0 0
  %543 = vmatprep.subr.bf16.mxu0 0
  %544 = vmatpush1.bf16.msra.mxu0 0
  %545 = vmatprep.subr.bf16.mxu0 0
  %546 = vmatpush1.bf16.msra.mxu0 0
  %547 = vmatprep.subr.bf16.mxu0 0
  %548 = vmatpush1.bf16.msra.mxu0 0
  %549 = vmatprep.subr.bf16.mxu0 0
  %550 = vmatpush1.bf16.msra.mxu0 0
  %551 = vmatprep.subr.bf16.mxu0 0
  %552 = vmatpush1.bf16.msra.mxu0 %v55
  %553 = vmatprep.subr.bf16.mxu0 0
  %554 = vmatpush1.bf16.msra.mxu0 %v54
  %555 = vmatprep.subr.bf16.mxu0 0
  %556 = vmatpush2.bf16.msra.mxu0 0
  %557 = vmatprep.subr.bf16.mxu0 0
  %558 = vmatpush2.bf16.msra.mxu0 0
  %559 = vmatprep.subr.bf16.mxu0 0
  %560 = vmatpush2.bf16.msra.mxu0 0
  %561 = vmatprep.subr.bf16.mxu0 0
  %562 = vmatpush2.bf16.msra.mxu0 0
  %563 = vmatprep.subr.bf16.mxu0 0
  %564 = vmatpush2.bf16.msra.mxu0 0
  %565 = vmatprep.subr.bf16.mxu0 0
  %566 = vmatpush2.bf16.msra.mxu0 0
  %567 = vmatprep.subr.bf16.mxu0 0
  %568 = vmatpush2.bf16.msra.mxu0 0
  %569 = vmatprep.subr.bf16.mxu0 0
  %570 = vmatpush2.bf16.msra.mxu0 0
  %571 = vmatprep.mubr.bf16.mxu0 0
  %572 = vmatmul.mubr.bf16.gmra.mxu0 %v537
  %v573 = vpop.f32.mrf.mxu0
  %v574 = vadd.f32 0.0, %v573
  %v575 = vpop.f32.mrf.mxu0
  %v576 = vpop.f32.mrf.mxu0
  %v577 = vpop.f32.mrf.mxu0
  %578 = vdwg.mxu0
  %v579 = vadd.f32 %v531, %v574
  %v580 = vxor.u32 %v579, 2147483648
  %v581 = vmul.f32 %v580, 1.442695
  %v582 = vpow.pop %v581
  %v583 = vadd.f32 %v582, 1.0
  %v584 = vrcp.pop %v583
  %v585 = vmul.f32 1.0, %v584
  %v586 = vtanh.pop %v579
  %v587 = vmul.f32 %v585, %v445
  %589 = vrot.lane.b32.xlu0 %v586, 64
  %v590 = vpop.permute.xlu0 %589
  %v592 = vmul.f32 %v585, %v590
  %594 = vrot.lane.b32.xlu0 %v592, 32
  %v595 = vpop.permute.xlu0 %594
  %v597 = vadd.f32 %v587, %v595
  %v598 = vtanh.pop %v597
  %600 = vrot.lane.b32.xlu0 %v598, 64
  %v601 = vpop.permute.xlu0 %600
  %v603 = vmul.f32 %v585, %v601
  %605 = vrot.lane.b32.xlu0 %v603, 32
  %v606 = vpop.permute.xlu0 %605
  %609 = vrot.lane.b32.xlu0 %v529, 64
  %v610 = vpop.permute.xlu0 %609
  %v612 = vsel %vm58, %v606, %v610
  %v613 = vpack.c.bf16 %v612, %v612
  %v615 = vsel %vm157, %v613, 0
  %617 = vmatprep.subr.bf16.mxu0 0
  %618 = vmatpush1.bf16.msra.mxu0 0
  %619 = vmatprep.subr.bf16.mxu0 0
  %620 = vmatpush1.bf16.msra.mxu0 0
  %621 = vmatprep.subr.bf16.mxu0 0
  %622 = vmatpush1.bf16.msra.mxu0 0
  %623 = vmatprep.subr.bf16.mxu0 0
  %624 = vmatpush1.bf16.msra.mxu0 0
  %625 = vmatprep.subr.bf16.mxu0 0
  %626 = vmatpush1.bf16.msra.mxu0 %v152
  %627 = vmatprep.subr.bf16.mxu0 0
  %628 = vmatpush1.bf16.msra.mxu0 %v151
  %629 = vmatprep.subr.bf16.mxu0 0
  %630 = vmatpush1.bf16.msra.mxu0 %v150
  %631 = vmatprep.subr.bf16.mxu0 0
  %632 = vmatpush1.bf16.msra.mxu0 %v149
  %633 = vmatprep.subr.bf16.mxu0 0
  %634 = vmatpush2.bf16.msra.mxu0 0
  %635 = vmatprep.subr.bf16.mxu0 0
  %636 = vmatpush2.bf16.msra.mxu0 0
  %637 = vmatprep.subr.bf16.mxu0 0
  %638 = vmatpush2.bf16.msra.mxu0 0
  %639 = vmatprep.subr.bf16.mxu0 0
  %640 = vmatpush2.bf16.msra.mxu0 0
  %641 = vmatprep.subr.bf16.mxu0 0
  %642 = vmatpush2.bf16.msra.mxu0 0
  %643 = vmatprep.subr.bf16.mxu0 0
  %644 = vmatpush2.bf16.msra.mxu0 0
  %645 = vmatprep.subr.bf16.mxu0 0
  %646 = vmatpush2.bf16.msra.mxu0 0
  %647 = vmatprep.subr.bf16.mxu0 0
  %648 = vmatpush2.bf16.msra.mxu0 0
  %649 = vmatprep.mubr.bf16.mxu0 0
  %650 = vmatmul.mubr.bf16.gmra.mxu0 %v615
  %v651 = vpop.f32.mrf.mxu0
  %v652 = vadd.f32 0.0, %v651
  %v653 = vpop.f32.mrf.mxu0
  %v654 = vpop.f32.mrf.mxu0
  %v655 = vpop.f32.mrf.mxu0
  %656 = vdwg.mxu0
  %v657 = vadd.f32 %v43, %v652
  %v658 = vxor.u32 %v657, 2147483648
  %v659 = vmul.f32 %v658, 1.442695
  %v660 = vpow.pop %v659
  %v661 = vadd.f32 %v660, 1.0
  %v662 = vrcp.pop %v661
  %v663 = vmul.f32 1.0, %v662
  %v664 = vtanh.pop %v657
  %v665 = vmul.f32 %v663, %v523
  %667 = vrot.lane.b32.xlu0 %v664, 64
  %v668 = vpop.permute.xlu0 %667
  %v670 = vmul.f32 %v663, %v668
  %672 = vrot.lane.b32.xlu0 %v670, 32
  %v673 = vpop.permute.xlu0 %672
  %v675 = vadd.f32 %v665, %v673
  %v676 = vtanh.pop %v675
  %678 = vrot.lane.b32.xlu0 %v676, 64
  %v679 = vpop.permute.xlu0 %678
  %v681 = vmul.f32 %v663, %v679
  %s682 = scalar_lea.vmem %s0, 8
  %v683 = vld [vmem:[%s682] sm:$0x3]
  %v684 = vpack.c.bf16 %v603, %v603
  %686 = vrot.lane.b32.xlu0 %v684, 32
  %v687 = vpop.permute.xlu0 %686
  %v689 = vsel %vm58, %v687, 0
  %691 = vmatprep.subr.bf16.mxu0 0
  %692 = vmatpush1.bf16.msra.mxu0 0
  %693 = vmatprep.subr.bf16.mxu0 0
  %694 = vmatpush1.bf16.msra.mxu0 0
  %695 = vmatprep.subr.bf16.mxu0 0
  %696 = vmatpush1.bf16.msra.mxu0 0
  %697 = vmatprep.subr.bf16.mxu0 0
  %698 = vmatpush1.bf16.msra.mxu0 0
  %699 = vmatprep.subr.bf16.mxu0 0
  %700 = vmatpush1.bf16.msra.mxu0 0
  %701 = vmatprep.subr.bf16.mxu0 0
  %702 = vmatpush1.bf16.msra.mxu0 0
  %703 = vmatprep.subr.bf16.mxu0 0
  %704 = vmatpush1.bf16.msra.mxu0 %v55
  %705 = vmatprep.subr.bf16.mxu0 0
  %706 = vmatpush1.bf16.msra.mxu0 %v54
  %707 = vmatprep.subr.bf16.mxu0 0
  %708 = vmatpush2.bf16.msra.mxu0 0
  %709 = vmatprep.subr.bf16.mxu0 0
  %710 = vmatpush2.bf16.msra.mxu0 0
  %711 = vmatprep.subr.bf16.mxu0 0
  %712 = vmatpush2.bf16.msra.mxu0 0
  %713 = vmatprep.subr.bf16.mxu0 0
  %714 = vmatpush2.bf16.msra.mxu0 0
  %715 = vmatprep.subr.bf16.mxu0 0
  %716 = vmatpush2.bf16.msra.mxu0 0
  %717 = vmatprep.subr.bf16.mxu0 0
  %718 = vmatpush2.bf16.msra.mxu0 0
  %719 = vmatprep.subr.bf16.mxu0 0
  %720 = vmatpush2.bf16.msra.mxu0 0
  %721 = vmatprep.subr.bf16.mxu0 0
  %722 = vmatpush2.bf16.msra.mxu0 0
  %723 = vmatprep.mubr.bf16.mxu0 0
  %724 = vmatmul.mubr.bf16.gmra.mxu0 %v689
  %v725 = vpop.f32.mrf.mxu0
  %v726 = vadd.f32 0.0, %v725
  %v727 = vpop.f32.mrf.mxu0
  %v728 = vpop.f32.mrf.mxu0
  %v729 = vpop.f32.mrf.mxu0
  %730 = vdwg.mxu0
  %v731 = vadd.f32 %v683, %v726
  %v732 = vxor.u32 %v731, 2147483648
  %v733 = vmul.f32 %v732, 1.442695
  %v734 = vpow.pop %v733
  %v735 = vadd.f32 %v734, 1.0
  %v736 = vrcp.pop %v735
  %v737 = vmul.f32 1.0, %v736
  %v738 = vtanh.pop %v731
  %v739 = vmul.f32 %v737, %v597
  %741 = vrot.lane.b32.xlu0 %v738, 64
  %v742 = vpop.permute.xlu0 %741
  %v744 = vmul.f32 %v737, %v742
  %746 = vrot.lane.b32.xlu0 %v744, 32
  %v747 = vpop.permute.xlu0 %746
  %v749 = vadd.f32 %v739, %v747
  %v750 = vtanh.pop %v749
  %752 = vrot.lane.b32.xlu0 %v750, 64
  %v753 = vpop.permute.xlu0 %752
  %v755 = vmul.f32 %v737, %v753
  %757 = vrot.lane.b32.xlu0 %v755, 32
  %v758 = vpop.permute.xlu0 %757
  %761 = vrot.lane.b32.xlu0 %v681, 64
  %v762 = vpop.permute.xlu0 %761
  %v764 = vsel %vm58, %v758, %v762
  %v765 = vpack.c.bf16 %v764, %v764
  %v767 = vsel %vm157, %v765, 0
  %769 = vmatprep.subr.bf16.mxu0 0
  %770 = vmatpush1.bf16.msra.mxu0 0
  %771 = vmatprep.subr.bf16.mxu0 0
  %772 = vmatpush1.bf16.msra.mxu0 0
  %773 = vmatprep.subr.bf16.mxu0 0
  %774 = vmatpush1.bf16.msra.mxu0 0
  %775 = vmatprep.subr.bf16.mxu0 0
  %776 = vmatpush1.bf16.msra.mxu0 0
  %777 = vmatprep.subr.bf16.mxu0 0
  %778 = vmatpush1.bf16.msra.mxu0 %v152
  %779 = vmatprep.subr.bf16.mxu0 0
  %780 = vmatpush1.bf16.msra.mxu0 %v151
  %781 = vmatprep.subr.bf16.mxu0 0
  %782 = vmatpush1.bf16.msra.mxu0 %v150
  %783 = vmatprep.subr.bf16.mxu0 0
  %784 = vmatpush1.bf16.msra.mxu0 %v149
  %785 = vmatprep.subr.bf16.mxu0 0
  %786 = vmatpush2.bf16.msra.mxu0 0
  %787 = vmatprep.subr.bf16.mxu0 0
  %788 = vmatpush2.bf16.msra.mxu0 0
  %789 = vmatprep.subr.bf16.mxu0 0
  %790 = vmatpush2.bf16.msra.mxu0 0
  %791 = vmatprep.subr.bf16.mxu0 0
  %792 = vmatpush2.bf16.msra.mxu0 0
  %793 = vmatprep.subr.bf16.mxu0 0
  %794 = vmatpush2.bf16.msra.mxu0 0
  %795 = vmatprep.subr.bf16.mxu0 0
  %796 = vmatpush2.bf16.msra.mxu0 0
  %797 = vmatprep.subr.bf16.mxu0 0
  %798 = vmatpush2.bf16.msra.mxu0 0
  %799 = vmatprep.subr.bf16.mxu0 0
  %800 = vmatpush2.bf16.msra.mxu0 0
  %801 = vmatprep.mubr.bf16.mxu0 0
  %802 = vmatmul.mubr.bf16.gmra.mxu0 %v767
  %v803 = vpop.f32.mrf.mxu0
  %v804 = vadd.f32 0.0, %v803
  %v805 = vpop.f32.mrf.mxu0
  %v806 = vpop.f32.mrf.mxu0
  %v807 = vpop.f32.mrf.mxu0
  %808 = vdwg.mxu0
  %v809 = vadd.f32 %v43, %v804
  %v810 = vxor.u32 %v809, 2147483648
  %v811 = vmul.f32 %v810, 1.442695
  %v812 = vpow.pop %v811
  %v813 = vadd.f32 %v812, 1.0
  %v814 = vrcp.pop %v813
  %v815 = vmul.f32 1.0, %v814
  %v816 = vtanh.pop %v809
  %v817 = vmul.f32 %v815, %v675
  %819 = vrot.lane.b32.xlu0 %v816, 64
  %v820 = vpop.permute.xlu0 %819
  %v822 = vmul.f32 %v815, %v820
  %824 = vrot.lane.b32.xlu0 %v822, 32
  %v825 = vpop.permute.xlu0 %824
  %v827 = vadd.f32 %v817, %v825
  %v828 = vtanh.pop %v827
  %830 = vrot.lane.b32.xlu0 %v828, 64
  %v831 = vpop.permute.xlu0 %830
  %v833 = vmul.f32 %v815, %v831
  %s834 = scalar_lea.vmem %s0, 10
  %v835 = vld [vmem:[%s834] sm:$0x3]
  %v836 = vpack.c.bf16 %v755, %v755
  %838 = vrot.lane.b32.xlu0 %v836, 32
  %v839 = vpop.permute.xlu0 %838
  %v841 = vsel %vm58, %v839, 0
  %843 = vmatprep.subr.bf16.mxu0 0
  %844 = vmatpush1.bf16.msra.mxu0 0
  %845 = vmatprep.subr.bf16.mxu0 0
  %846 = vmatpush1.bf16.msra.mxu0 0
  %847 = vmatprep.subr.bf16.mxu0 0
  %848 = vmatpush1.bf16.msra.mxu0 0
  %849 = vmatprep.subr.bf16.mxu0 0
  %850 = vmatpush1.bf16.msra.mxu0 0
  %851 = vmatprep.subr.bf16.mxu0 0
  %852 = vmatpush1.bf16.msra.mxu0 0
  %853 = vmatprep.subr.bf16.mxu0 0
  %854 = vmatpush1.bf16.msra.mxu0 0
  %855 = vmatprep.subr.bf16.mxu0 0
  %856 = vmatpush1.bf16.msra.mxu0 %v55
  %857 = vmatprep.subr.bf16.mxu0 0
  %858 = vmatpush1.bf16.msra.mxu0 %v54
  %859 = vmatprep.subr.bf16.mxu0 0
  %860 = vmatpush2.bf16.msra.mxu0 0
  %861 = vmatprep.subr.bf16.mxu0 0
  %862 = vmatpush2.bf16.msra.mxu0 0
  %863 = vmatprep.subr.bf16.mxu0 0
  %864 = vmatpush2.bf16.msra.mxu0 0
  %865 = vmatprep.subr.bf16.mxu0 0
  %866 = vmatpush2.bf16.msra.mxu0 0
  %867 = vmatprep.subr.bf16.mxu0 0
  %868 = vmatpush2.bf16.msra.mxu0 0
  %869 = vmatprep.subr.bf16.mxu0 0
  %870 = vmatpush2.bf16.msra.mxu0 0
  %871 = vmatprep.subr.bf16.mxu0 0
  %872 = vmatpush2.bf16.msra.mxu0 0
  %873 = vmatprep.subr.bf16.mxu0 0
  %874 = vmatpush2.bf16.msra.mxu0 0
  %875 = vmatprep.mubr.bf16.mxu0 0
  %876 = vmatmul.mubr.bf16.gmra.mxu0 %v841
  %v877 = vpop.f32.mrf.mxu0
  %v878 = vadd.f32 0.0, %v877
  %v879 = vpop.f32.mrf.mxu0
  %v880 = vpop.f32.mrf.mxu0
  %v881 = vpop.f32.mrf.mxu0
  %882 = vdwg.mxu0
  %v883 = vadd.f32 %v835, %v878
  %v884 = vxor.u32 %v883, 2147483648
  %v885 = vmul.f32 %v884, 1.442695
  %v886 = vpow.pop %v885
  %v887 = vadd.f32 %v886, 1.0
  %v888 = vrcp.pop %v887
  %v889 = vmul.f32 1.0, %v888
  %v890 = vtanh.pop %v883
  %v891 = vmul.f32 %v889, %v749
  %893 = vrot.lane.b32.xlu0 %v890, 64
  %v894 = vpop.permute.xlu0 %893
  %v896 = vmul.f32 %v889, %v894
  %898 = vrot.lane.b32.xlu0 %v896, 32
  %v899 = vpop.permute.xlu0 %898
  %v901 = vadd.f32 %v891, %v899
  %v902 = vtanh.pop %v901
  %904 = vrot.lane.b32.xlu0 %v902, 64
  %v905 = vpop.permute.xlu0 %904
  %v907 = vmul.f32 %v889, %v905
  %909 = vrot.lane.b32.xlu0 %v907, 32
  %v910 = vpop.permute.xlu0 %909
  %913 = vrot.lane.b32.xlu0 %v833, 64
  %v914 = vpop.permute.xlu0 %913
  %v916 = vsel %vm58, %v910, %v914
  %v917 = vpack.c.bf16 %v916, %v916
  %v919 = vsel %vm157, %v917, 0
  %921 = vmatprep.subr.bf16.mxu0 0
  %922 = vmatpush1.bf16.msra.mxu0 0
  %923 = vmatprep.subr.bf16.mxu0 0
  %924 = vmatpush1.bf16.msra.mxu0 0
  %925 = vmatprep.subr.bf16.mxu0 0
  %926 = vmatpush1.bf16.msra.mxu0 0
  %927 = vmatprep.subr.bf16.mxu0 0
  %928 = vmatpush1.bf16.msra.mxu0 0
  %929 = vmatprep.subr.bf16.mxu0 0
  %930 = vmatpush1.bf16.msra.mxu0 %v152
  %931 = vmatprep.subr.bf16.mxu0 0
  %932 = vmatpush1.bf16.msra.mxu0 %v151
  %933 = vmatprep.subr.bf16.mxu0 0
  %934 = vmatpush1.bf16.msra.mxu0 %v150
  %935 = vmatprep.subr.bf16.mxu0 0
  %936 = vmatpush1.bf16.msra.mxu0 %v149
  %937 = vmatprep.subr.bf16.mxu0 0
  %938 = vmatpush2.bf16.msra.mxu0 0
  %939 = vmatprep.subr.bf16.mxu0 0
  %940 = vmatpush2.bf16.msra.mxu0 0
  %941 = vmatprep.subr.bf16.mxu0 0
  %942 = vmatpush2.bf16.msra.mxu0 0
  %943 = vmatprep.subr.bf16.mxu0 0
  %944 = vmatpush2.bf16.msra.mxu0 0
  %945 = vmatprep.subr.bf16.mxu0 0
  %946 = vmatpush2.bf16.msra.mxu0 0
  %947 = vmatprep.subr.bf16.mxu0 0
  %948 = vmatpush2.bf16.msra.mxu0 0
  %949 = vmatprep.subr.bf16.mxu0 0
  %950 = vmatpush2.bf16.msra.mxu0 0
  %951 = vmatprep.subr.bf16.mxu0 0
  %952 = vmatpush2.bf16.msra.mxu0 0
  %953 = vmatprep.mubr.bf16.mxu0 0
  %954 = vmatmul.mubr.bf16.gmra.mxu0 %v919
  %v955 = vpop.f32.mrf.mxu0
  %v956 = vadd.f32 0.0, %v955
  %v957 = vpop.f32.mrf.mxu0
  %v958 = vpop.f32.mrf.mxu0
  %v959 = vpop.f32.mrf.mxu0
  %960 = vdwg.mxu0
  %v961 = vadd.f32 %v43, %v956
  %v962 = vxor.u32 %v961, 2147483648
  %v963 = vmul.f32 %v962, 1.442695
  %v964 = vpow.pop %v963
  %v965 = vadd.f32 %v964, 1.0
  %v966 = vrcp.pop %v965
  %v967 = vmul.f32 1.0, %v966
  %v968 = vtanh.pop %v961
  %v969 = vmul.f32 %v967, %v827
  %971 = vrot.lane.b32.xlu0 %v968, 64
  %v972 = vpop.permute.xlu0 %971
  %v974 = vmul.f32 %v967, %v972
  %976 = vrot.lane.b32.xlu0 %v974, 32
  %v977 = vpop.permute.xlu0 %976
  %v979 = vadd.f32 %v969, %v977
  %v980 = vtanh.pop %v979
  %982 = vrot.lane.b32.xlu0 %v980, 64
  %v983 = vpop.permute.xlu0 %982
  %v985 = vmul.f32 %v967, %v983
  %s986 = scalar_lea.vmem %s0, 12
  %v987 = vld [vmem:[%s986] sm:$0x3]
  %v988 = vpack.c.bf16 %v907, %v907
  %990 = vrot.lane.b32.xlu0 %v988, 32
  %v991 = vpop.permute.xlu0 %990
  %v993 = vsel %vm58, %v991, 0
  %995 = vmatprep.subr.bf16.mxu0 0
  %996 = vmatpush1.bf16.msra.mxu0 0
  %997 = vmatprep.subr.bf16.mxu0 0
  %998 = vmatpush1.bf16.msra.mxu0 0
  %999 = vmatprep.subr.bf16.mxu0 0
  %1000 = vmatpush1.bf16.msra.mxu0 0
  %1001 = vmatprep.subr.bf16.mxu0 0
  %1002 = vmatpush1.bf16.msra.mxu0 0
  %1003 = vmatprep.subr.bf16.mxu0 0
  %1004 = vmatpush1.bf16.msra.mxu0 0
  %1005 = vmatprep.subr.bf16.mxu0 0
  %1006 = vmatpush1.bf16.msra.mxu0 0
  %1007 = vmatprep.subr.bf16.mxu0 0
  %1008 = vmatpush1.bf16.msra.mxu0 %v55
  %1009 = vmatprep.subr.bf16.mxu0 0
  %1010 = vmatpush1.bf16.msra.mxu0 %v54
  %1011 = vmatprep.subr.bf16.mxu0 0
  %1012 = vmatpush2.bf16.msra.mxu0 0
  %1013 = vmatprep.subr.bf16.mxu0 0
  %1014 = vmatpush2.bf16.msra.mxu0 0
  %1015 = vmatprep.subr.bf16.mxu0 0
  %1016 = vmatpush2.bf16.msra.mxu0 0
  %1017 = vmatprep.subr.bf16.mxu0 0
  %1018 = vmatpush2.bf16.msra.mxu0 0
  %1019 = vmatprep.subr.bf16.mxu0 0
  %1020 = vmatpush2.bf16.msra.mxu0 0
  %1021 = vmatprep.subr.bf16.mxu0 0
  %1022 = vmatpush2.bf16.msra.mxu0 0
  %1023 = vmatprep.subr.bf16.mxu0 0
  %1024 = vmatpush2.bf16.msra.mxu0 0
  %1025 = vmatprep.subr.bf16.mxu0 0
  %1026 = vmatpush2.bf16.msra.mxu0 0
  %1027 = vmatprep.mubr.bf16.mxu0 0
  %1028 = vmatmul.mubr.bf16.gmra.mxu0 %v993
  %v1029 = vpop.f32.mrf.mxu0
  %v1030 = vadd.f32 0.0, %v1029
  %v1031 = vpop.f32.mrf.mxu0
  %v1032 = vpop.f32.mrf.mxu0
  %v1033 = vpop.f32.mrf.mxu0
  %1034 = vdwg.mxu0
  %v1035 = vadd.f32 %v987, %v1030
  %v1036 = vxor.u32 %v1035, 2147483648
  %v1037 = vmul.f32 %v1036, 1.442695
  %v1038 = vpow.pop %v1037
  %v1039 = vadd.f32 %v1038, 1.0
  %v1040 = vrcp.pop %v1039
  %v1041 = vmul.f32 1.0, %v1040
  %v1042 = vtanh.pop %v1035
  %v1043 = vmul.f32 %v1041, %v901
  %1045 = vrot.lane.b32.xlu0 %v1042, 64
  %v1046 = vpop.permute.xlu0 %1045
  %v1048 = vmul.f32 %v1041, %v1046
  %1050 = vrot.lane.b32.xlu0 %v1048, 32
  %v1051 = vpop.permute.xlu0 %1050
  %v1053 = vadd.f32 %v1043, %v1051
  %v1054 = vtanh.pop %v1053
  %1056 = vrot.lane.b32.xlu0 %v1054, 64
  %v1057 = vpop.permute.xlu0 %1056
  %v1059 = vmul.f32 %v1041, %v1057
  %1061 = vrot.lane.b32.xlu0 %v1059, 32
  %v1062 = vpop.permute.xlu0 %1061
  %1065 = vrot.lane.b32.xlu0 %v985, 64
  %v1066 = vpop.permute.xlu0 %1065
  %v1068 = vsel %vm58, %v1062, %v1066
  %v1069 = vpack.c.bf16 %v1068, %v1068
  %v1071 = vsel %vm157, %v1069, 0
  %1073 = vmatprep.subr.bf16.mxu0 0
  %1074 = vmatpush1.bf16.msra.mxu0 0
  %1075 = vmatprep.subr.bf16.mxu0 0
  %1076 = vmatpush1.bf16.msra.mxu0 0
  %1077 = vmatprep.subr.bf16.mxu0 0
  %1078 = vmatpush1.bf16.msra.mxu0 0
  %1079 = vmatprep.subr.bf16.mxu0 0
  %1080 = vmatpush1.bf16.msra.mxu0 0
  %1081 = vmatprep.subr.bf16.mxu0 0
  %1082 = vmatpush1.bf16.msra.mxu0 %v152
  %1083 = vmatprep.subr.bf16.mxu0 0
  %1084 = vmatpush1.bf16.msra.mxu0 %v151
  %1085 = vmatprep.subr.bf16.mxu0 0
  %1086 = vmatpush1.bf16.msra.mxu0 %v150
  %1087 = vmatprep.subr.bf16.mxu0 0
  %1088 = vmatpush1.bf16.msra.mxu0 %v149
  %1089 = vmatprep.subr.bf16.mxu0 0
  %1090 = vmatpush2.bf16.msra.mxu0 0
  %1091 = vmatprep.subr.bf16.mxu0 0
  %1092 = vmatpush2.bf16.msra.mxu0 0
  %1093 = vmatprep.subr.bf16.mxu0 0
  %1094 = vmatpush2.bf16.msra.mxu0 0
  %1095 = vmatprep.subr.bf16.mxu0 0
  %1096 = vmatpush2.bf16.msra.mxu0 0
  %1097 = vmatprep.subr.bf16.mxu0 0
  %1098 = vmatpush2.bf16.msra.mxu0 0
  %1099 = vmatprep.subr.bf16.mxu0 0
  %1100 = vmatpush2.bf16.msra.mxu0 0
  %1101 = vmatprep.subr.bf16.mxu0 0
  %1102 = vmatpush2.bf16.msra.mxu0 0
  %1103 = vmatprep.subr.bf16.mxu0 0
  %1104 = vmatpush2.bf16.msra.mxu0 0
  %1105 = vmatprep.mubr.bf16.mxu0 0
  %1106 = vmatmul.mubr.bf16.gmra.mxu0 %v1071
  %v1107 = vpop.f32.mrf.mxu0
  %v1108 = vadd.f32 0.0, %v1107
  %v1109 = vpop.f32.mrf.mxu0
  %v1110 = vpop.f32.mrf.mxu0
  %v1111 = vpop.f32.mrf.mxu0
  %1112 = vdwg.mxu0
  %v1113 = vadd.f32 %v43, %v1108
  %v1114 = vxor.u32 %v1113, 2147483648
  %v1115 = vmul.f32 %v1114, 1.442695
  %v1116 = vpow.pop %v1115
  %v1117 = vadd.f32 %v1116, 1.0
  %v1118 = vrcp.pop %v1117
  %v1119 = vmul.f32 1.0, %v1118
  %v1120 = vtanh.pop %v1113
  %v1121 = vmul.f32 %v1119, %v979
  %1123 = vrot.lane.b32.xlu0 %v1120, 64
  %v1124 = vpop.permute.xlu0 %1123
  %v1126 = vmul.f32 %v1119, %v1124
  %1128 = vrot.lane.b32.xlu0 %v1126, 32
  %v1129 = vpop.permute.xlu0 %1128
  %v1131 = vadd.f32 %v1121, %v1129
  %v1132 = vtanh.pop %v1131
  %1134 = vrot.lane.b32.xlu0 %v1132, 64
  %v1135 = vpop.permute.xlu0 %1134
  %v1137 = vmul.f32 %v1119, %v1135
  %s1138 = scalar_lea.vmem %s0, 14
  %v1139 = vld [vmem:[%s1138] sm:$0x3]
  %v1140 = vpack.c.bf16 %v1059, %v1059
  %1142 = vrot.lane.b32.xlu0 %v1140, 32
  %v1143 = vpop.permute.xlu0 %1142
  %v1145 = vsel %vm58, %v1143, 0
  %1147 = vmatprep.subr.bf16.mxu0 0
  %1148 = vmatpush1.bf16.msra.mxu0 0
  %1149 = vmatprep.subr.bf16.mxu0 0
  %1150 = vmatpush1.bf16.msra.mxu0 0
  %1151 = vmatprep.subr.bf16.mxu0 0
  %1152 = vmatpush1.bf16.msra.mxu0 0
  %1153 = vmatprep.subr.bf16.mxu0 0
  %1154 = vmatpush1.bf16.msra.mxu0 0
  %1155 = vmatprep.subr.bf16.mxu0 0
  %1156 = vmatpush1.bf16.msra.mxu0 0
  %1157 = vmatprep.subr.bf16.mxu0 0
  %1158 = vmatpush1.bf16.msra.mxu0 0
  %1159 = vmatprep.subr.bf16.mxu0 0
  %1160 = vmatpush1.bf16.msra.mxu0 %v55
  %1161 = vmatprep.subr.bf16.mxu0 0
  %1162 = vmatpush1.bf16.msra.mxu0 %v54
  %1163 = vmatprep.subr.bf16.mxu0 0
  %1164 = vmatpush2.bf16.msra.mxu0 0
  %1165 = vmatprep.subr.bf16.mxu0 0
  %1166 = vmatpush2.bf16.msra.mxu0 0
  %1167 = vmatprep.subr.bf16.mxu0 0
  %1168 = vmatpush2.bf16.msra.mxu0 0
  %1169 = vmatprep.subr.bf16.mxu0 0
  %1170 = vmatpush2.bf16.msra.mxu0 0
  %1171 = vmatprep.subr.bf16.mxu0 0
  %1172 = vmatpush2.bf16.msra.mxu0 0
  %1173 = vmatprep.subr.bf16.mxu0 0
  %1174 = vmatpush2.bf16.msra.mxu0 0
  %1175 = vmatprep.subr.bf16.mxu0 0
  %1176 = vmatpush2.bf16.msra.mxu0 0
  %1177 = vmatprep.subr.bf16.mxu0 0
  %1178 = vmatpush2.bf16.msra.mxu0 0
  %1179 = vmatprep.mubr.bf16.mxu0 0
  %1180 = vmatmul.mubr.bf16.gmra.mxu0 %v1145
  %v1181 = vpop.f32.mrf.mxu0
  %v1182 = vadd.f32 0.0, %v1181
  %v1183 = vpop.f32.mrf.mxu0
  %v1184 = vpop.f32.mrf.mxu0
  %v1185 = vpop.f32.mrf.mxu0
  %1186 = vdwg.mxu0
  %v1187 = vadd.f32 %v1139, %v1182
  %v1188 = vxor.u32 %v1187, 2147483648
  %v1189 = vmul.f32 %v1188, 1.442695
  %v1190 = vpow.pop %v1189
  %v1191 = vadd.f32 %v1190, 1.0
  %v1192 = vrcp.pop %v1191
  %v1193 = vmul.f32 1.0, %v1192
  %v1194 = vtanh.pop %v1187
  %v1195 = vmul.f32 %v1193, %v1053
  %1197 = vrot.lane.b32.xlu0 %v1194, 64
  %v1198 = vpop.permute.xlu0 %1197
  %v1200 = vmul.f32 %v1193, %v1198
  %1202 = vrot.lane.b32.xlu0 %v1200, 32
  %v1203 = vpop.permute.xlu0 %1202
  %v1205 = vadd.f32 %v1195, %v1203
  %v1206 = vtanh.pop %v1205
  %1208 = vrot.lane.b32.xlu0 %v1206, 64
  %v1209 = vpop.permute.xlu0 %1208
  %v1211 = vmul.f32 %v1193, %v1209
  %1213 = vrot.lane.b32.xlu0 %v1211, 32
  %v1214 = vpop.permute.xlu0 %1213
  %1217 = vrot.lane.b32.xlu0 %v1137, 64
  %v1218 = vpop.permute.xlu0 %1217
  %v1220 = vsel %vm58, %v1214, %v1218
  %v1221 = vpack.c.bf16 %v1220, %v1220
  %v1223 = vsel %vm157, %v1221, 0
  %1225 = vmatprep.subr.bf16.mxu0 0
  %1226 = vmatpush1.bf16.msra.mxu0 0
  %1227 = vmatprep.subr.bf16.mxu0 0
  %1228 = vmatpush1.bf16.msra.mxu0 0
  %1229 = vmatprep.subr.bf16.mxu0 0
  %1230 = vmatpush1.bf16.msra.mxu0 0
  %1231 = vmatprep.subr.bf16.mxu0 0
  %1232 = vmatpush1.bf16.msra.mxu0 0
  %1233 = vmatprep.subr.bf16.mxu0 0
  %1234 = vmatpush1.bf16.msra.mxu0 %v152
  %1235 = vmatprep.subr.bf16.mxu0 0
  %1236 = vmatpush1.bf16.msra.mxu0 %v151
  %1237 = vmatprep.subr.bf16.mxu0 0
  %1238 = vmatpush1.bf16.msra.mxu0 %v150
  %1239 = vmatprep.subr.bf16.mxu0 0
  %1240 = vmatpush1.bf16.msra.mxu0 %v149
  %1241 = vmatprep.subr.bf16.mxu0 0
  %1242 = vmatpush2.bf16.msra.mxu0 0
  %1243 = vmatprep.subr.bf16.mxu0 0
  %1244 = vmatpush2.bf16.msra.mxu0 0
  %1245 = vmatprep.subr.bf16.mxu0 0
  %1246 = vmatpush2.bf16.msra.mxu0 0
  %1247 = vmatprep.subr.bf16.mxu0 0
  %1248 = vmatpush2.bf16.msra.mxu0 0
  %1249 = vmatprep.subr.bf16.mxu0 0
  %1250 = vmatpush2.bf16.msra.mxu0 0
  %1251 = vmatprep.subr.bf16.mxu0 0
  %1252 = vmatpush2.bf16.msra.mxu0 0
  %1253 = vmatprep.subr.bf16.mxu0 0
  %1254 = vmatpush2.bf16.msra.mxu0 0
  %1255 = vmatprep.subr.bf16.mxu0 0
  %1256 = vmatpush2.bf16.msra.mxu0 0
  %1257 = vmatprep.mubr.bf16.mxu0 0
  %1258 = vmatmul.mubr.bf16.gmra.mxu0 %v1223
  %v1259 = vpop.f32.mrf.mxu0
  %v1260 = vadd.f32 0.0, %v1259
  %v1261 = vpop.f32.mrf.mxu0
  %v1262 = vpop.f32.mrf.mxu0
  %v1263 = vpop.f32.mrf.mxu0
  %1264 = vdwg.mxu0
  %v1265 = vadd.f32 %v43, %v1260
  %v1266 = vxor.u32 %v1265, 2147483648
  %v1267 = vmul.f32 %v1266, 1.442695
  %v1268 = vpow.pop %v1267
  %v1269 = vadd.f32 %v1268, 1.0
  %v1270 = vrcp.pop %v1269
  %v1271 = vmul.f32 1.0, %v1270
  %v1272 = vtanh.pop %v1265
  %v1273 = vmul.f32 %v1271, %v1131
  %1275 = vrot.lane.b32.xlu0 %v1272, 64
  %v1276 = vpop.permute.xlu0 %1275
  %v1278 = vmul.f32 %v1271, %v1276
  %1280 = vrot.lane.b32.xlu0 %v1278, 32
  %v1281 = vpop.permute.xlu0 %1280
  %v1283 = vadd.f32 %v1273, %v1281
  %v1284 = vtanh.pop %v1283
  %1286 = vrot.lane.b32.xlu0 %v1284, 64
  %v1287 = vpop.permute.xlu0 %1286
  %v1289 = vmul.f32 %v1271, %v1287
  %v1290 = vld [vmem:[%s4] sm:$0xff]
  %v1291 = vld [vmem:[%s4 + $0x8] sm:$0xff]
  %v1292 = vld [vmem:[%s4 + $0x10] sm:$0xff]
  %v1293 = vld [vmem:[%s4 + $0x18] sm:$0xff]
  %v1294 = vld [vmem:[#allocation2] sm:$0x1]
  %v1296 = vlaneseq
  %v1297 = vshrl.u32 %v1296, 7
  %v1298 = vsub.s32 0, %v1297
  %v1299 = vrot.slane %v1294, %v1298
  %1302 = vrot.lane.b32.xlu0 %v1289, 32
  %v1303 = vpop.permute.xlu0 %1302
  %v1304 = vsel %vm58, %v1303, 0
  %1306 = vmatprep.subr.mxu0 0.0
  %1307 = vmatpush1.msra.mxu0 0.0
  %1308 = vmatprep.subr.mxu0 0.0
  %1309 = vmatpush1.msra.mxu0 0.0
  %1310 = vmatprep.subr.mxu0 0.0
  %1311 = vmatpush1.msra.mxu0 0.0
  %1312 = vmatprep.subr.mxu0 0.0
  %1313 = vmatpush1.msra.mxu0 0.0
  %1314 = vmatprep.subr.mxu0 0.0
  %1315 = vmatpush1.msra.mxu0 0.0
  %1316 = vmatprep.subr.mxu0 0.0
  %1317 = vmatpush1.msra.mxu0 0.0
  %1318 = vmatprep.subr.mxu0 0.0
  %1319 = vmatpush1.msra.mxu0 0.0
  %1320 = vmatprep.subr.mxu0 0.0
  %1321 = vmatpush1.msra.mxu0 0.0
  %1322 = vmatprep.subr.mxu0 0.0
  %1323 = vmatpush1.msra.mxu0 0.0
  %1324 = vmatprep.subr.mxu0 0.0
  %1325 = vmatpush1.msra.mxu0 0.0
  %1326 = vmatprep.subr.mxu0 0.0
  %1327 = vmatpush1.msra.mxu0 0.0
  %1328 = vmatprep.subr.mxu0 0.0
  %1329 = vmatpush1.msra.mxu0 0.0
  %1330 = vmatprep.subr.mxu0 0.0
  %1331 = vmatpush1.msra.mxu0 %v1293
  %1332 = vmatprep.subr.mxu0 0.0
  %1333 = vmatpush1.msra.mxu0 %v1292
  %1334 = vmatprep.subr.mxu0 0.0
  %1335 = vmatpush1.msra.mxu0 %v1291
  %1336 = vmatprep.subr.mxu0 0.0
  %1337 = vmatpush1.msra.mxu0 %v1290
  %1338 = vmatprep.subr.mxu0 0.0
  %1339 = vmatpush2.msra.mxu0 0.0
  %1340 = vmatprep.subr.mxu0 0.0
  %1341 = vmatpush2.msra.mxu0 0.0
  %1342 = vmatprep.subr.mxu0 0.0
  %1343 = vmatpush2.msra.mxu0 0.0
  %1344 = vmatprep.subr.mxu0 0.0
  %1345 = vmatpush2.msra.mxu0 0.0
  %1346 = vmatprep.subr.mxu0 0.0
  %1347 = vmatpush2.msra.mxu0 0.0
  %1348 = vmatprep.subr.mxu0 0.0
  %1349 = vmatpush2.msra.mxu0 0.0
  %1350 = vmatprep.subr.mxu0 0.0
  %1351 = vmatpush2.msra.mxu0 0.0
  %1352 = vmatprep.subr.mxu0 0.0
  %1353 = vmatpush2.msra.mxu0 0.0
  %1354 = vmatprep.subr.mxu0 0.0
  %1355 = vmatpush2.msra.mxu0 0.0
  %1356 = vmatprep.subr.mxu0 0.0
  %1357 = vmatpush2.msra.mxu0 0.0
  %1358 = vmatprep.subr.mxu0 0.0
  %1359 = vmatpush2.msra.mxu0 0.0
  %1360 = vmatprep.subr.mxu0 0.0
  %1361 = vmatpush2.msra.mxu0 0.0
  %1362 = vmatprep.subr.mxu0 0.0
  %1363 = vmatpush2.msra.mxu0 0.0
  %1364 = vmatprep.subr.mxu0 0.0
  %1365 = vmatpush2.msra.mxu0 0.0
  %1366 = vmatprep.subr.mxu0 0.0
  %1367 = vmatpush2.msra.mxu0 0.0
  %1368 = vmatprep.subr.mxu0 0.0
  %1369 = vmatpush2.msra.mxu0 0.0
  %1370 = vmatprep.mubr.f32.mxu0 0.0
  %1371 = vmatmul.mubr.f32.gmra.mxu0 %v1304
  %v1372 = vpop.f32.mrf.mxu0
  %v1373 = vadd.f32 %v1299, %v1372
  %v1374 = vpop.f32.mrf.mxu0
  %1375 = vdwg.mxu0
  %vm1376 = vcmask 1024
  %1377 = vst.msk [vmem:[%s6] sm:$0x3] %vm1376, %v1373
  // Predicated region
  $region26: #{lstm_model_forward.1} parent=0 // pred_check
    _
  $region27: #{lstm_model_forward.1} parent=0 // pred_check_branch
    %1379 = sbr.rel (0) target = $region29
  $region28: #{lstm_model_forward.1} parent=0 // pred_region
    _
  $region29: #{lstm_model_forward.1} parent=0 // pred_fallthru
    _
  // Predicated region
  $region30: #{lstm_model_forward.1} parent=0 // pred_check
    _
  $region31: #{lstm_model_forward.1} parent=0 // pred_check_branch
    %1381 = sbr.rel (0) target = $region33
  $region32: #{lstm_model_forward.1} parent=0 // pred_region
    _
  $region33: #{lstm_model_forward.1} parent=0 // pred_fallthru
    _

</llo_original>
